<compile_context>
chip_gen: v7x
topology: tpu7x:2x2x1
jax: 0.10.0
libtpu: 0.0.40
codegen_flags: <defaults>
</compile_context>

<pallas_src>
import functools

import jax
import jax.numpy as jnp
from jax.experimental import pallas as pl
from jax.experimental.pallas import tpu as pltpu

LATENT_QUBITS = 3
LATENT_DIM = 2 ** LATENT_QUBITS  # 8
HID_PAD = 128                    # pad 64-wide hidden dims up to one full lane tile
LANE = 128


def _round_up(n, m):
    return ((n + m - 1) // m) * m


def _supports_bf16_vpu():
    """bf16 VALU/EUP exists on v6e/v7x; not on v5e/v5p or older (or unknown)."""
    try:
        kind = jax.devices()[0].device_kind.lower()
    except Exception:
        return False
    return not any(tag in kind for tag in ("v2", "v3", "v4", "v5"))


# ---------------------------------------------------------------------------
# Kernel
# ---------------------------------------------------------------------------
def _autoencoder_kernel(x_ref,
                        w1, b1, w2, b2, w3, b3,
                        w45, b45,                 # fused encoder-out @ decoder-in
                        w6, b6, w7, b7, w8, b8,
                        out_ref, *, act_dtype, exact_sigmoid):
    """Fused forward pass for one batch tile. All weights live fully in VMEM."""

    def linear(h, w_ref, b_ref, out_dtype):
        # Feed the MXU in the weight dtype (bf16 fast path), accumulate in f32,
        # then do the epilogue (bias add / ReLU) in out_dtype.
        acc = jnp.dot(h.astype(w_ref.dtype), w_ref[...],
                      preferred_element_type=jnp.float32)
        return acc.astype(out_dtype) + b_ref[...].astype(out_dtype)

    def lin_relu(h, w_ref, b_ref):
        return jnp.maximum(linear(h, w_ref, b_ref, act_dtype), 0)

    # Single cast of the input tile, directly into the MXU input dtype.
    h = x_ref[...].astype(w1.dtype)

    # Encoder (layers 1-3) + fused bottleneck (layer4 @ layer5) + decoder (6-8).
    h = lin_relu(h, w1, b1)        # Dp  -> 256
    h = lin_relu(h, w2, b2)        # 256 -> 128
    h = lin_relu(h, w3, b3)        # 128 -> 128 (64 padded to 128, pads are exact 0)
    h = lin_relu(h, w45, b45)      # 128 -> 128 fused (64->8->64, no activation inside)
    h = lin_relu(h, w6, b6)        # 128 -> 128
    h = lin_relu(h, w7, b7)        # 128 -> 256
    y = linear(h, w8, b8, jnp.float32)   # 256 -> Dp, epilogue + sigmoid in f32

    if exact_sigmoid:
        out = 1.0 / (1.0 + jnp.exp(-y))
    else:
        out = 0.5 * (jnp.tanh(0.5 * y) + 1.0)   # single EUP op per element
    out_ref[...] = out.astype(out_ref.dtype)


# ---------------------------------------------------------------------------
# Parameter construction / preparation
# ---------------------------------------------------------------------------
def make_params(input_dim, latent_dim, key):
    """Deterministic init matching nn.Linear default (uniform +-1/sqrt(fan_in)).
    Weights are stored as [in, out] (transposed vs PyTorch)."""
    dims = [
        (input_dim, 256), (256, 128), (128, 64), (64, latent_dim),   # encoder
        (latent_dim, 64), (64, 128), (128, 256), (256, input_dim),   # decoder
    ]
    params = []
    for (fan_in, fan_out) in dims:
        key, kw, kb = jax.random.split(key, 3)
        bound = 1.0 / (fan_in ** 0.5)
        w = jax.random.uniform(kw, (fan_in, fan_out), jnp.float32, -bound, bound)
        b = jax.random.uniform(kb, (1, fan_out), jnp.float32, -bound, bound)
        params.append((w, b))
    return params


def prepare_params(params, use_bf16=True, hid_pad=HID_PAD, lane=LANE):
    """Fuse the activation-free bottleneck, pad 64-wide dims to 128, pad the
    input/output feature dim to a multiple of 128 (lane-dense in/out tiles for any D),
    optionally cast weights (only) to bf16.  Returns a flat tuple of 14 arrays."""
    (w1, b1), (w2, b2), (w3, b3), (w4, b4), (w5, b5), (w6, b6), (w7, b7), (w8, b8) = params

    # z = h @ w4 + b4 ; d = z @ w5 + b5 (no activation on z)  =>  d = h @ w45 + b45
    w45 = w4 @ w5                # [64, 64]
    b45 = b4 @ w5 + b5           # [1, 64]

    def pad_cols(w, n):
        return jnp.pad(w, ((0, 0), (0, n - w.shape[1])))

    def pad_rows(w, n):
        return jnp.pad(w, ((0, n - w.shape[0]), (0, 0)))

    def pad_bias(b, n):
        return jnp.pad(b, ((0, 0), (0, n - b.shape[1])))

    dp_in = _round_up(w1.shape[0], lane)     # padded input feature dim
    dp_out = _round_up(w8.shape[1], lane)    # padded output feature dim

    w1p = pad_rows(w1, dp_in)                         # Dp  -> 256 (zero rows for pad cols of x)
    w3p = pad_cols(w3, hid_pad)                       # 128 -> 128 (out padded 64->128)
    b3p = pad_bias(b3, hid_pad)
    w45p = pad_rows(pad_cols(w45, hid_pad), hid_pad)  # 128 -> 128 (both padded)
    b45p = pad_bias(b45, hid_pad)
    w6p = pad_rows(w6, hid_pad)                       # 128 -> 128 (in padded 64->128)
    w8p = pad_cols(w8, dp_out)                        # 256 -> Dp (zero output cols)
    b8p = pad_bias(b8, dp_out)

    weights = [w1p, w2, w3p, w45p, w6p, w7, w8p]
    biases = [b1, b2, b3p, b45p, b6, b7, b8p]
    if use_bf16:
        weights = [w.astype(jnp.bfloat16) for w in weights]
    flat = []
    for w, b in zip(weights, biases):
        flat.append(w)
        flat.append(b.astype(jnp.float32))
    return tuple(flat)


def _choose_tile_b(batch, max_tile):
    """Pick the batch tile: never pad small batches to a full tile; keep >=2 grid
    steps (and even when cheap) so both v7x TensorCores run; cap at max_tile."""
    b8 = _round_up(batch, 8)
    if b8 <= 8:
        return b8
    half = _round_up((b8 + 1) // 2, 8)
    tile = min(max_tile, half)
    ntiles = -(-b8 // tile)
    if ntiles > 1 and ntiles % 2 == 1:
        ntiles += 1
        tile = _round_up(-(-b8 // ntiles), 8)
    return tile


# ---------------------------------------------------------------------------
# pallas_call wrapper
# ---------------------------------------------------------------------------
@functools.partial(jax.jit, static_argnames=("max_tile", "exact"))
def autoencoder_forward(x, prepared, max_tile=1024, exact=False):
    """x: [B, input_dim] float32. prepared: output of prepare_params().
    Returns reconstruction [B, input_dim].  exact=True -> f32 epilogue + exact sigmoid."""
    B, D = x.shape
    Dp = _round_up(D, LANE)

    tile_b = _choose_tile_b(B, max_tile)
    num_tiles = -(-B // tile_b)
    Bp = num_tiles * tile_b
    if Bp != B or Dp != D:
        x = jnp.pad(x, ((0, Bp - B), (0, Dp - D)))

    flat = list(prepared)
    assert flat[0].shape[0] == Dp, "prepared params padding does not match input dim"

    # bf16 epilogue only where the VPU/EUP supports bf16 (v6e/v7x) and on the fast path.
    w_dtype = flat[0].dtype
    use_bf16_act = (w_dtype == jnp.bfloat16) and (not exact) and _supports_bf16_vpu()
    act_dtype = jnp.bfloat16 if use_bf16_act else jnp.float32

    # Parameters are small (~1 MiB total) and use a constant index_map, so their DMA
    # only happens on grid step 0.
    param_specs = [pl.BlockSpec(a.shape, lambda i: (0, 0)) for a in flat]

    # Cost estimate (helps XLA scheduling around the custom call).
    layer_dims = [flat[k].shape for k in range(0, len(flat), 2)]
    flops = int(2 * Bp * sum(i * o for i, o in layer_dims))
    transcendentals = int(Bp * Dp)                        # one tanh/exp per output element
    param_bytes = int(sum(a.size * a.dtype.itemsize for a in flat))
    io_bytes = int(2 * Bp * Dp * 4)
    cost = pl.CostEstimate(flops=flops, transcendentals=transcendentals,
                           bytes_accessed=io_bytes + param_bytes)

    # Explicit VMEM budget (double-buffered in/out tiles + params + live activations),
    # clamped to stay safe on v7x's 64 MiB physical VMEM.
    tile_io = 2 * 2 * tile_b * Dp * 4
    act_bytes = 6 * tile_b * max(256, Dp) * 4
    vmem_limit = int(tile_io + 2 * param_bytes + act_bytes + (4 << 20))
    vmem_limit = int(min(max(vmem_limit, 32 << 20), 48 << 20))

    kernel = functools.partial(_autoencoder_kernel,
                               act_dtype=act_dtype, exact_sigmoid=exact)

    out = pl.pallas_call(
        kernel,
        out_shape=jax.ShapeDtypeStruct((Bp, Dp), x.dtype),
        grid_spec=pltpu.PrefetchScalarGridSpec(
            num_scalar_prefetch=0,
            grid=(Bp // tile_b,),
            in_specs=[pl.BlockSpec((tile_b, Dp), lambda i: (i, 0))] + param_specs,
            out_specs=pl.BlockSpec((tile_b, Dp), lambda i: (i, 0)),
        ),
        compiler_params=pltpu.CompilerParams(
            dimension_semantics=("parallel",),   # batch tiles shard across TCs (v7x)
            vmem_limit_bytes=vmem_limit,
        ),
        cost_estimate=cost,
    )(x, *flat)
    return out[:B, :D]


# ---------------------------------------------------------------------------
# Pure-JAX reference (matches the original, unfused/unpadded PyTorch math)
# ---------------------------------------------------------------------------
def autoencoder_ref(x, params):
    h = x
    for i in range(3):                       # encoder ReLU layers
        w, b = params[i]
        h = jnp.maximum(h @ w + b, 0.0)
    w, b = params[3]                         # latent, no activation
    h = h @ w + b
    for i in range(4, 7):                    # decoder ReLU layers
        w, b = params[i]
        h = jnp.maximum(h @ w + b, 0.0)
    w, b = params[7]
    h = h @ w + b
    return jax.nn.sigmoid(h)


if __name__ == "__main__":
    key = jax.random.PRNGKey(0)
    k_params, k_x, k_x2, k_p2, k_x3 = jax.random.split(key, 5)

    input_dim = 256   # e.g. a flattened 16x16 image
    batch = 16        # small demo batch (tile adapts; no padding to 256 any more)

    params = make_params(input_dim, LATENT_DIM, k_params)
    x = jax.random.uniform(k_x, (batch, input_dim), jnp.float32)
    ref = autoencoder_ref(x, params)

    # 1) f32 weights, f32 epilogue, exact sigmoid: tight correctness check
    #    (bottleneck fusion only changes summation order -> ~1e-6 level differences).
    prep_f32 = prepare_params(params, use_bf16=False)
    out_f32 = jax.block_until_ready(autoencoder_forward(x, prep_f32, exact=True))
    assert out_f32.shape == (batch, input_dim)
    assert jnp.allclose(out_f32, ref, atol=1e-4, rtol=1e-4), "f32 kernel mismatch vs reference"

    # 2) bf16 weights + bf16 epilogue (where supported) + tanh sigmoid: fast path.
    prep_bf16 = prepare_params(params, use_bf16=True)
    out_bf16 = jax.block_until_ready(autoencoder_forward(x, prep_bf16, exact=False))
    assert out_bf16.shape == (batch, input_dim)
    assert jnp.allclose(out_bf16, ref, atol=5e-2, rtol=5e-2), "bf16 kernel mismatch vs reference"

    # 3) Larger ragged batch -> exercises multi-tile grid + batch padding.
    big_batch = 1000
    x_big = jax.random.uniform(k_x2, (big_batch, input_dim), jnp.float32)
    ref_big = autoencoder_ref(x_big, params)
    out_big = jax.block_until_ready(autoencoder_forward(x_big, prep_bf16, exact=False))
    assert out_big.shape == (big_batch, input_dim)
    assert jnp.allclose(out_big, ref_big, atol=5e-2, rtol=5e-2), "multi-tile mismatch vs reference"

    # 4) Non-128-multiple feature dim -> exercises lane-padding of D (Dp=256 for D=200).
    odd_dim = 200
    params2 = make_params(odd_dim, LATENT_DIM, k_p2)
    x_odd = jax.random.uniform(k_x3, (12, odd_dim), jnp.float32)
    ref_odd = autoencoder_ref(x_odd, params2)
    prep2 = prepare_params(params2, use_bf16=False)
    out_odd = jax.block_until_ready(autoencoder_forward(x_odd, prep2, exact=True))
    assert out_odd.shape == (12, odd_dim)
    assert jnp.allclose(out_odd, ref_odd, atol=1e-4, rtol=1e-4), "D-padded kernel mismatch vs reference"

    print("KERNEL_OK")
</pallas_src>

<mosaic_0001>
module attributes {stable_mosaic.version = 11 : i64} {
  func.func @_autoencoder_kernel(%arg0: i32, %arg1: memref<8x256xf32, #tpu.memory_space<vmem>>, %arg2: memref<256x256xf32, #tpu.memory_space<vmem>>, %arg3: memref<1x256xf32, #tpu.memory_space<vmem>>, %arg4: memref<256x128xf32, #tpu.memory_space<vmem>>, %arg5: memref<1x128xf32, #tpu.memory_space<vmem>>, %arg6: memref<128x128xf32, #tpu.memory_space<vmem>>, %arg7: memref<1x128xf32, #tpu.memory_space<vmem>>, %arg8: memref<128x128xf32, #tpu.memory_space<vmem>>, %arg9: memref<1x128xf32, #tpu.memory_space<vmem>>, %arg10: memref<128x128xf32, #tpu.memory_space<vmem>>, %arg11: memref<1x128xf32, #tpu.memory_space<vmem>>, %arg12: memref<128x256xf32, #tpu.memory_space<vmem>>, %arg13: memref<1x256xf32, #tpu.memory_space<vmem>>, %arg14: memref<256x256xf32, #tpu.memory_space<vmem>>, %arg15: memref<1x256xf32, #tpu.memory_space<vmem>>, %arg16: memref<8x256xf32, #tpu.memory_space<vmem>>) attributes {dimension_semantics = [#tpu.dimension_semantics<parallel>], iteration_bounds = array<i64: 2>, scalar_prefetch = 0 : i64, scratch_operands = 0 : i64, tpu.core_type = #tpu.core_type<tc>, window_params = [{transform_indices = @transform_0, window_bounds = array<i64: 8, 256>}, {pipeline_mode = #tpu.pipeline_mode<synchronous>, transform_indices = @transform_1, window_bounds = array<i64: 256, 256>}, {pipeline_mode = #tpu.pipeline_mode<synchronous>, transform_indices = @transform_2, window_bounds = array<i64: 1, 256>}, {pipeline_mode = #tpu.pipeline_mode<synchronous>, transform_indices = @transform_3, window_bounds = array<i64: 256, 128>}, {pipeline_mode = #tpu.pipeline_mode<synchronous>, transform_indices = @transform_4, window_bounds = array<i64: 1, 128>}, {pipeline_mode = #tpu.pipeline_mode<synchronous>, transform_indices = @transform_5, window_bounds = array<i64: 128, 128>}, {pipeline_mode = #tpu.pipeline_mode<synchronous>, transform_indices = @transform_6, window_bounds = array<i64: 1, 128>}, {pipeline_mode = #tpu.pipeline_mode<synchronous>, transform_indices = @transform_7, window_bounds = array<i64: 128, 128>}, {pipeline_mode = #tpu.pipeline_mode<synchronous>, transform_indices = @transform_8, window_bounds = array<i64: 1, 128>}, {pipeline_mode = #tpu.pipeline_mode<synchronous>, transform_indices = @transform_9, window_bounds = array<i64: 128, 128>}, {pipeline_mode = #tpu.pipeline_mode<synchronous>, transform_indices = @transform_10, window_bounds = array<i64: 1, 128>}, {pipeline_mode = #tpu.pipeline_mode<synchronous>, transform_indices = @transform_11, window_bounds = array<i64: 128, 256>}, {pipeline_mode = #tpu.pipeline_mode<synchronous>, transform_indices = @transform_12, window_bounds = array<i64: 1, 256>}, {pipeline_mode = #tpu.pipeline_mode<synchronous>, transform_indices = @transform_13, window_bounds = array<i64: 256, 256>}, {pipeline_mode = #tpu.pipeline_mode<synchronous>, transform_indices = @transform_14, window_bounds = array<i64: 1, 256>}, {transform_indices = @transform_15, window_bounds = array<i64: 8, 256>}]} {
    %c0 = arith.constant 0 : index
    %c0_0 = arith.constant 0 : index
    %0 = vector.load %arg1[%c0, %c0_0] : memref<8x256xf32, #tpu.memory_space<vmem>>, vector<8x256xf32>
    %c0_1 = arith.constant 0 : index
    %c0_2 = arith.constant 0 : index
    %1 = vector.load %arg2[%c0_1, %c0_2] : memref<256x256xf32, #tpu.memory_space<vmem>>, vector<256x256xf32>
    %cst = arith.constant dense<0.000000e+00> : vector<8x256xf32>
    %2 = tpu.matmul %0, %1, %cst {dimension_numbers = #tpu.dot_dimension_numbers<[1], [0], [0], [1], [0, 0, 1, 1], [], []>} : vector<8x256xf32>, vector<256x256xf32>, vector<8x256xf32> -> vector<8x256xf32>
    %c0_3 = arith.constant 0 : index
    %c0_4 = arith.constant 0 : index
    %3 = vector.load %arg3[%c0_3, %c0_4] : memref<1x256xf32, #tpu.memory_space<vmem>>, vector<1x256xf32>
    %4 = vector.broadcast %3 : vector<1x256xf32> to vector<8x256xf32>
    %5 = arith.addf %2, %4 : vector<8x256xf32>
    %cst_5 = arith.constant 0.000000e+00 : f32
    %6 = vector.broadcast %cst_5 : f32 to vector<8x256xf32>
    %7 = arith.maximumf %5, %6 : vector<8x256xf32>
    %c0_6 = arith.constant 0 : index
    %c0_7 = arith.constant 0 : index
    %8 = vector.load %arg4[%c0_6, %c0_7] : memref<256x128xf32, #tpu.memory_space<vmem>>, vector<256x128xf32>
    %cst_8 = arith.constant dense<0.000000e+00> : vector<8x128xf32>
    %9 = tpu.matmul %7, %8, %cst_8 {dimension_numbers = #tpu.dot_dimension_numbers<[1], [0], [0], [1], [0, 0, 1, 1], [], []>} : vector<8x256xf32>, vector<256x128xf32>, vector<8x128xf32> -> vector<8x128xf32>
    %c0_9 = arith.constant 0 : index
    %c0_10 = arith.constant 0 : index
    %10 = vector.load %arg5[%c0_9, %c0_10] : memref<1x128xf32, #tpu.memory_space<vmem>>, vector<1x128xf32>
    %11 = vector.broadcast %10 : vector<1x128xf32> to vector<8x128xf32>
    %12 = arith.addf %9, %11 : vector<8x128xf32>
    %cst_11 = arith.constant 0.000000e+00 : f32
    %13 = vector.broadcast %cst_11 : f32 to vector<8x128xf32>
    %14 = arith.maximumf %12, %13 : vector<8x128xf32>
    %c0_12 = arith.constant 0 : index
    %c0_13 = arith.constant 0 : index
    %15 = vector.load %arg6[%c0_12, %c0_13] : memref<128x128xf32, #tpu.memory_space<vmem>>, vector<128x128xf32>
    %cst_14 = arith.constant dense<0.000000e+00> : vector<8x128xf32>
    %16 = tpu.matmul %14, %15, %cst_14 {dimension_numbers = #tpu.dot_dimension_numbers<[1], [0], [0], [1], [0, 0, 1, 1], [], []>} : vector<8x128xf32>, vector<128x128xf32>, vector<8x128xf32> -> vector<8x128xf32>
    %c0_15 = arith.constant 0 : index
    %c0_16 = arith.constant 0 : index
    %17 = vector.load %arg7[%c0_15, %c0_16] : memref<1x128xf32, #tpu.memory_space<vmem>>, vector<1x128xf32>
    %18 = vector.broadcast %17 : vector<1x128xf32> to vector<8x128xf32>
    %19 = arith.addf %16, %18 : vector<8x128xf32>
    %cst_17 = arith.constant 0.000000e+00 : f32
    %20 = vector.broadcast %cst_17 : f32 to vector<8x128xf32>
    %21 = arith.maximumf %19, %20 : vector<8x128xf32>
    %c0_18 = arith.constant 0 : index
    %c0_19 = arith.constant 0 : index
    %22 = vector.load %arg8[%c0_18, %c0_19] : memref<128x128xf32, #tpu.memory_space<vmem>>, vector<128x128xf32>
    %cst_20 = arith.constant dense<0.000000e+00> : vector<8x128xf32>
    %23 = tpu.matmul %21, %22, %cst_20 {dimension_numbers = #tpu.dot_dimension_numbers<[1], [0], [0], [1], [0, 0, 1, 1], [], []>} : vector<8x128xf32>, vector<128x128xf32>, vector<8x128xf32> -> vector<8x128xf32>
    %c0_21 = arith.constant 0 : index
    %c0_22 = arith.constant 0 : index
    %24 = vector.load %arg9[%c0_21, %c0_22] : memref<1x128xf32, #tpu.memory_space<vmem>>, vector<1x128xf32>
    %25 = vector.broadcast %24 : vector<1x128xf32> to vector<8x128xf32>
    %26 = arith.addf %23, %25 : vector<8x128xf32>
    %cst_23 = arith.constant 0.000000e+00 : f32
    %27 = vector.broadcast %cst_23 : f32 to vector<8x128xf32>
    %28 = arith.maximumf %26, %27 : vector<8x128xf32>
    %c0_24 = arith.constant 0 : index
    %c0_25 = arith.constant 0 : index
    %29 = vector.load %arg10[%c0_24, %c0_25] : memref<128x128xf32, #tpu.memory_space<vmem>>, vector<128x128xf32>
    %cst_26 = arith.constant dense<0.000000e+00> : vector<8x128xf32>
    %30 = tpu.matmul %28, %29, %cst_26 {dimension_numbers = #tpu.dot_dimension_numbers<[1], [0], [0], [1], [0, 0, 1, 1], [], []>} : vector<8x128xf32>, vector<128x128xf32>, vector<8x128xf32> -> vector<8x128xf32>
    %c0_27 = arith.constant 0 : index
    %c0_28 = arith.constant 0 : index
    %31 = vector.load %arg11[%c0_27, %c0_28] : memref<1x128xf32, #tpu.memory_space<vmem>>, vector<1x128xf32>
    %32 = vector.broadcast %31 : vector<1x128xf32> to vector<8x128xf32>
    %33 = arith.addf %30, %32 : vector<8x128xf32>
    %cst_29 = arith.constant 0.000000e+00 : f32
    %34 = vector.broadcast %cst_29 : f32 to vector<8x128xf32>
    %35 = arith.maximumf %33, %34 : vector<8x128xf32>
    %c0_30 = arith.constant 0 : index
    %c0_31 = arith.constant 0 : index
    %36 = vector.load %arg12[%c0_30, %c0_31] : memref<128x256xf32, #tpu.memory_space<vmem>>, vector<128x256xf32>
    %cst_32 = arith.constant dense<0.000000e+00> : vector<8x256xf32>
    %37 = tpu.matmul %35, %36, %cst_32 {dimension_numbers = #tpu.dot_dimension_numbers<[1], [0], [0], [1], [0, 0, 1, 1], [], []>} : vector<8x128xf32>, vector<128x256xf32>, vector<8x256xf32> -> vector<8x256xf32>
    %c0_33 = arith.constant 0 : index
    %c0_34 = arith.constant 0 : index
    %38 = vector.load %arg13[%c0_33, %c0_34] : memref<1x256xf32, #tpu.memory_space<vmem>>, vector<1x256xf32>
    %39 = vector.broadcast %38 : vector<1x256xf32> to vector<8x256xf32>
    %40 = arith.addf %37, %39 : vector<8x256xf32>
    %cst_35 = arith.constant 0.000000e+00 : f32
    %41 = vector.broadcast %cst_35 : f32 to vector<8x256xf32>
    %42 = arith.maximumf %40, %41 : vector<8x256xf32>
    %c0_36 = arith.constant 0 : index
    %c0_37 = arith.constant 0 : index
    %43 = vector.load %arg14[%c0_36, %c0_37] : memref<256x256xf32, #tpu.memory_space<vmem>>, vector<256x256xf32>
    %cst_38 = arith.constant dense<0.000000e+00> : vector<8x256xf32>
    %44 = tpu.matmul %42, %43, %cst_38 {dimension_numbers = #tpu.dot_dimension_numbers<[1], [0], [0], [1], [0, 0, 1, 1], [], []>} : vector<8x256xf32>, vector<256x256xf32>, vector<8x256xf32> -> vector<8x256xf32>
    %c0_39 = arith.constant 0 : index
    %c0_40 = arith.constant 0 : index
    %45 = vector.load %arg15[%c0_39, %c0_40] : memref<1x256xf32, #tpu.memory_space<vmem>>, vector<1x256xf32>
    %46 = vector.broadcast %45 : vector<1x256xf32> to vector<8x256xf32>
    %47 = arith.addf %44, %46 : vector<8x256xf32>
    %cst_41 = arith.constant 0.000000e+00 : f32
    %48 = vector.broadcast %cst_41 : f32 to vector<8x256xf32>
    %49 = arith.subf %48, %47 : vector<8x256xf32>
    %50 = math.exp %49 : vector<8x256xf32>
    %cst_42 = arith.constant 1.000000e+00 : f32
    %51 = vector.broadcast %cst_42 : f32 to vector<8x256xf32>
    %52 = arith.addf %51, %50 : vector<8x256xf32>
    %cst_43 = arith.constant 1.000000e+00 : f32
    %53 = vector.broadcast %cst_43 : f32 to vector<8x256xf32>
    %54 = arith.divf %53, %52 : vector<8x256xf32>
    %c0_44 = arith.constant 0 : index
    %c0_45 = arith.constant 0 : index
    %55 = vector.load %arg16[%c0_44, %c0_45] : memref<8x256xf32, #tpu.memory_space<vmem>>, vector<8x256xf32>
    tpu.vector_store %arg16[%c0_44, %c0_45], %54 {strides = array<i32>} : memref<8x256xf32, #tpu.memory_space<vmem>>, vector<8x256xf32>,
    return
  }
  func.func @transform_0(%arg0: i32) -> (i32, i32) {
    %c0_i32 = arith.constant 0 : i32
    %c0_i32_0 = arith.constant 0 : i32
    return %arg0, %c0_i32 : i32, i32
  }
  func.func @transform_1(%arg0: i32) -> (i32, i32) {
    %c0_i32 = arith.constant 0 : i32
    %c0_i32_0 = arith.constant 0 : i32
    %c0_i32_1 = arith.constant 0 : i32
    return %c0_i32, %c0_i32_0 : i32, i32
  }
  func.func @transform_2(%arg0: i32) -> (i32, i32) {
    %c0_i32 = arith.constant 0 : i32
    %c0_i32_0 = arith.constant 0 : i32
    %c0_i32_1 = arith.constant 0 : i32
    return %c0_i32, %c0_i32_0 : i32, i32
  }
  func.func @transform_3(%arg0: i32) -> (i32, i32) {
    %c0_i32 = arith.constant 0 : i32
    %c0_i32_0 = arith.constant 0 : i32
    %c0_i32_1 = arith.constant 0 : i32
    return %c0_i32, %c0_i32_0 : i32, i32
  }
  func.func @transform_4(%arg0: i32) -> (i32, i32) {
    %c0_i32 = arith.constant 0 : i32
    %c0_i32_0 = arith.constant 0 : i32
    %c0_i32_1 = arith.constant 0 : i32
    return %c0_i32, %c0_i32_0 : i32, i32
  }
  func.func @transform_5(%arg0: i32) -> (i32, i32) {
    %c0_i32 = arith.constant 0 : i32
    %c0_i32_0 = arith.constant 0 : i32
    %c0_i32_1 = arith.constant 0 : i32
    return %c0_i32, %c0_i32_0 : i32, i32
  }
  func.func @transform_6(%arg0: i32) -> (i32, i32) {
    %c0_i32 = arith.constant 0 : i32
    %c0_i32_0 = arith.constant 0 : i32
    %c0_i32_1 = arith.constant 0 : i32
    return %c0_i32, %c0_i32_0 : i32, i32
  }
  func.func @transform_7(%arg0: i32) -> (i32, i32) {
    %c0_i32 = arith.constant 0 : i32
    %c0_i32_0 = arith.constant 0 : i32
    %c0_i32_1 = arith.constant 0 : i32
    return %c0_i32, %c0_i32_0 : i32, i32
  }
  func.func @transform_8(%arg0: i32) -> (i32, i32) {
    %c0_i32 = arith.constant 0 : i32
    %c0_i32_0 = arith.constant 0 : i32
    %c0_i32_1 = arith.constant 0 : i32
    return %c0_i32, %c0_i32_0 : i32, i32
  }
  func.func @transform_9(%arg0: i32) -> (i32, i32) {
    %c0_i32 = arith.constant 0 : i32
    %c0_i32_0 = arith.constant 0 : i32
    %c0_i32_1 = arith.constant 0 : i32
    return %c0_i32, %c0_i32_0 : i32, i32
  }
  func.func @transform_10(%arg0: i32) -> (i32, i32) {
    %c0_i32 = arith.constant 0 : i32
    %c0_i32_0 = arith.constant 0 : i32
    %c0_i32_1 = arith.constant 0 : i32
    return %c0_i32, %c0_i32_0 : i32, i32
  }
  func.func @transform_11(%arg0: i32) -> (i32, i32) {
    %c0_i32 = arith.constant 0 : i32
    %c0_i32_0 = arith.constant 0 : i32
    %c0_i32_1 = arith.constant 0 : i32
    return %c0_i32, %c0_i32_0 : i32, i32
  }
  func.func @transform_12(%arg0: i32) -> (i32, i32) {
    %c0_i32 = arith.constant 0 : i32
    %c0_i32_0 = arith.constant 0 : i32
    %c0_i32_1 = arith.constant 0 : i32
    return %c0_i32, %c0_i32_0 : i32, i32
  }
  func.func @transform_13(%arg0: i32) -> (i32, i32) {
    %c0_i32 = arith.constant 0 : i32
    %c0_i32_0 = arith.constant 0 : i32
    %c0_i32_1 = arith.constant 0 : i32
    return %c0_i32, %c0_i32_0 : i32, i32
  }
  func.func @transform_14(%arg0: i32) -> (i32, i32) {
    %c0_i32 = arith.constant 0 : i32
    %c0_i32_0 = arith.constant 0 : i32
    %c0_i32_1 = arith.constant 0 : i32
    return %c0_i32, %c0_i32_0 : i32, i32
  }
  func.func @transform_15(%arg0: i32) -> (i32, i32) {
    %c0_i32 = arith.constant 0 : i32
    %c0_i32_0 = arith.constant 0 : i32
    return %arg0, %c0_i32 : i32, i32
  }
}

</mosaic_0001>

<llo_original>
// kernel: autoencoder_forward.1
$region0: #{autoencoder_forward.1}
  #allocation0 [shape = 'u32[]', space=smem, size = 0x4, offset = 0x4, fixed_abs, tag = 'smem constant byte address 0x4 - core index']
  #allocation1 [shape = 'u32[144,128]{1,0:T(1,128)}', space=vmem, size = 0x12000, scoped, tag = 'internal scratch']
  %s0 = inlined_call_operand.hbm [shape: f32[16,256], index: 0, kind: input, shape index: {}]
  %s1 = inlined_call_operand.hbm [shape: f32[256,256], index: 1, kind: input, shape index: {}]
  %s2 = inlined_call_operand.vmem [shape: f32[1,256], index: 2, kind: input, shape index: {}]
  %s3 = inlined_call_operand.hbm [shape: f32[256,128], index: 3, kind: input, shape index: {}]
  %s4 = inlined_call_operand.vmem [shape: f32[1,128], index: 4, kind: input, shape index: {}]
  %s5 = inlined_call_operand.hbm [shape: f32[128,128], index: 5, kind: input, shape index: {}]
  %s6 = inlined_call_operand.vmem [shape: f32[1,128], index: 6, kind: input, shape index: {}]
  %s7 = inlined_call_operand.hbm [shape: f32[128,128], index: 7, kind: input, shape index: {}]
  %s8 = inlined_call_operand.vmem [shape: f32[1,128], index: 8, kind: input, shape index: {}]
  %s9 = inlined_call_operand.hbm [shape: f32[128,128], index: 9, kind: input, shape index: {}]
  %s10 = inlined_call_operand.vmem [shape: f32[1,128], index: 10, kind: input, shape index: {}]
  %s11 = inlined_call_operand.hbm [shape: f32[128,256], index: 11, kind: input, shape index: {}]
  %s12 = inlined_call_operand.vmem [shape: f32[1,256], index: 12, kind: input, shape index: {}]
  %s13 = inlined_call_operand.hbm [shape: f32[256,256], index: 13, kind: input, shape index: {}]
  %s14 = inlined_call_operand.vmem [shape: f32[1,256], index: 14, kind: input, shape index: {}]
  %s15 = inlined_call_operand.hbm [shape: f32[16,256], index: 15, kind: output, shape index: {}]
  %s16 = sld [smem:[#allocation0]]
  $region125: #{autoencoder_forward.1} parent=0
    _
  %s18 = ssub.s32 1, %s16
  %s19 = scalar_select 0, %s18, %s16
  $region1: #{autoencoder_forward.1} parent=0
    #allocation2 [shape = 'u8[16384]{0}', space=vmem, size = 0x4000, scoped, tag = 'input window, operand 0']
    #allocation3 [shape = 's32[2]{0}', space=sflag, size = 0x8, scoped, tag = 'scoped memory for autoencoder_forward.1']
    #allocation4 [shape = 's32[2]{0}', space=sflag, size = 0x8, scoped, tag = 'scoped memory for autoencoder_forward.1']
    #allocation5 [shape = 'u8[262144]{0}', space=vmem, size = 0x40000, scoped, tag = 'input window, operand 1, single buffered']
    #allocation6 [shape = 's32[1]{0}', space=sflag, size = 0x4, scoped, tag = 'scoped memory for autoencoder_forward.1']
    #allocation7 [shape = 'u8[131072]{0}', space=vmem, size = 0x20000, scoped, tag = 'input window, operand 3, single buffered']
    #allocation8 [shape = 'u8[65536]{0}', space=vmem, size = 0x10000, scoped, tag = 'input window, operand 5, single buffered']
    #allocation9 [shape = 's32[1]{0}', space=sflag, size = 0x4, scoped, tag = 'scoped memory for autoencoder_forward.1']
    #allocation10 [shape = 'u8[65536]{0}', space=vmem, size = 0x10000, scoped, tag = 'input window, operand 7, single buffered']
    #allocation11 [shape = 'u8[65536]{0}', space=vmem, size = 0x10000, scoped, tag = 'input window, operand 9, single buffered']
    #allocation12 [shape = 's32[1]{0}', space=sflag, size = 0x4, scoped, tag = 'scoped memory for autoencoder_forward.1']
    #allocation13 [shape = 'u8[131072]{0}', space=vmem, size = 0x20000, scoped, tag = 'input window, operand 11, single buffered']
    #allocation14 [shape = 'u8[262144]{0}', space=vmem, size = 0x40000, scoped, tag = 'input window, operand 13, single buffered']
    #allocation15 [shape = 's32[1]{0}', space=sflag, size = 0x4, scoped, tag = 'scoped memory for autoencoder_forward.1']
    #allocation16 [shape = 'u8[16384]{0}', space=vmem, size = 0x4000, scoped, tag = 'output window, operand 0']
    %20 = vsyncpa [#allocation3], 0
    %s21 = scalar_lea.sflag [#allocation3], 1
    %22 = vsyncpa %s21, 0
    %23 = vsyncpa [#allocation6], 0
    %24 = vsyncpa [#allocation9], 0
    %25 = vsyncpa [#allocation12], 0
    %26 = vsyncpa [#allocation15], 0
    %27 = vsyncpa [#allocation4], 0
    %s28 = scalar_lea.sflag [#allocation4], 1
    %29 = vsyncpa %s28, 0
    loop: start=0, step=1, limit=4
    $region2: #{autoencoder_forward.1} parent=1 // loop_pre_header
      _
    $region3: #{autoencoder_forward.1} parent=1 // loop_header
      %s31 = sphi 0, %s35
      %p32 = scmp.ge.s32.totalorder %s31, 4
      %s41 = sphi 0, %s43
      %s44 = sphi 0, %s41
      %s45 = sphi 0, %s44
      %s61 = sphi 0, %s45
      %s65 = sphi 0, %s65
      %s67 = sphi 0, %s65
      %s68 = sphi 0, %s67
      %s82 = sphi 0, %s68
      %s86 = sphi 0, %s86
      %s88 = sphi 0, %s86
      %s89 = sphi 0, %s88
      %s103 = sphi 0, %s89
      %s107 = sphi 0, %s107
      %s109 = sphi 0, %s107
      %s110 = sphi 0, %s109
      %s124 = sphi 0, %s110
      %s128 = sphi 0, %s128
      %s130 = sphi 0, %s128
      %s131 = sphi 0, %s130
      %s145 = sphi 0, %s131
      %s149 = sphi 0, %s149
      %s151 = sphi 0, %s149
      %s152 = sphi 0, %s151
      %s166 = sphi 0, %s152
      %s170 = sphi 0, %s170
      %s172 = sphi 0, %s170
      %s173 = sphi 0, %s172
      %s187 = sphi 0, %s173
      %s191 = sphi 0, %s191
      %s193 = sphi 0, %s191
      %s194 = sphi 0, %s193
      %s208 = sphi 0, %s194
      %s212 = sphi 0, %s212
      %s214 = sphi 0, %s212
      %s215 = sphi 0, %s214
      %s229 = sphi 0, %s215
      %s233 = sphi 0, %s233
      %s235 = sphi 0, %s233
      %s236 = sphi 0, %s235
      %s250 = sphi 0, %s236
      %s254 = sphi 0, %s254
      %s256 = sphi 0, %s254
      %s257 = sphi 0, %s256
      %s271 = sphi 0, %s257
      %s275 = sphi 0, %s275
      %s277 = sphi 0, %s275
      %s278 = sphi 0, %s277
      %s292 = sphi 0, %s278
      %s296 = sphi 0, %s296
      %s298 = sphi 0, %s296
      %s299 = sphi 0, %s298
      %s313 = sphi 0, %s299
      %s317 = sphi 0, %s317
      %s319 = sphi 0, %s317
      %s320 = sphi 0, %s319
      %s334 = sphi 0, %s320
      %s338 = sphi 0, %s338
      %s340 = sphi 0, %s338
      %s341 = sphi 0, %s340
      %s355 = sphi 0, %s341
      %s361 = sphi 0, %s363
      %s364 = sphi 0, %s361
      %s365 = sphi 0, %s364
      %s381 = sphi 0, %s365
    $region4: #{autoencoder_forward.1} parent=1 // loop_header_branch
      %34 = sbr.rel (%p32) target = $region8
    $region5: #{autoencoder_forward.1} parent=1 // loop_body
      %s36 = ssub.s32 %s31, 1
      %s37 = ssub.s32 %s31, 2
      %s38 = sadd.s32 %s31, 1
      %s39 = ssub.s32 %s31, %s38
      %p40 = scmp.eq.s32.totalorder %s39, 0
      %s42 = sadd.s32 %s41, 1
      %s43 = scalar_select %p40, %s41, %s42
      %p46 = pneg %p40
      %p47 = scmp.eq.s32.totalorder %s31, 1
      %p48 = por %p46, %p47
      %p49 = scmp.ne.s32.totalorder %s41, %s44
      %p50 = scmp.eq.s32.totalorder %s31, 0
      %p51 = por %p49, %p50
      %p52 = scmp.ne.s32.totalorder %s41, %s44
      %p53 = scmp.eq.s32.totalorder %s36, 1
      %p54 = por %p52, %p53
      %p55 = scmp.ne.s32.totalorder %s44, %s45
      %p56 = scmp.eq.s32.totalorder %s36, 0
      %p57 = por %p55, %p56
      %p58 = scmp.ne.s32.totalorder %s44, %s45
      %p59 = scmp.eq.s32.totalorder %s37, 1
      %p60 = por %p58, %p59
      %p62 = scmp.ne.s32.totalorder %s45, %s61
      %p63 = scmp.eq.s32.totalorder %s37, 0
      %p64 = por %p62, %p63
      %s66 = sadd.s32 %s65, 1
      %p69 = scmp.eq.s32.totalorder %s31, 1
      %p70 = scmp.ne.s32.totalorder %s65, %s67
      %p71 = scmp.eq.s32.totalorder %s31, 0
      %p72 = por %p70, %p71
      %p73 = scmp.ne.s32.totalorder %s65, %s67
      %p74 = scmp.eq.s32.totalorder %s36, 1
      %p75 = por %p73, %p74
      %p76 = scmp.ne.s32.totalorder %s67, %s68
      %p77 = scmp.eq.s32.totalorder %s36, 0
      %p78 = por %p76, %p77
      %p79 = scmp.ne.s32.totalorder %s67, %s68
      %p80 = scmp.eq.s32.totalorder %s37, 1
      %p81 = por %p79, %p80
      %p83 = scmp.ne.s32.totalorder %s68, %s82
      %p84 = scmp.eq.s32.totalorder %s37, 0
      %p85 = por %p83, %p84
      %s87 = sadd.s32 %s86, 1
      %p90 = scmp.eq.s32.totalorder %s31, 1
      %p91 = scmp.ne.s32.totalorder %s86, %s88
      %p92 = scmp.eq.s32.totalorder %s31, 0
      %p93 = por %p91, %p92
      %p94 = scmp.ne.s32.totalorder %s86, %s88
      %p95 = scmp.eq.s32.totalorder %s36, 1
      %p96 = por %p94, %p95
      %p97 = scmp.ne.s32.totalorder %s88, %s89
      %p98 = scmp.eq.s32.totalorder %s36, 0
      %p99 = por %p97, %p98
      %p100 = scmp.ne.s32.totalorder %s88, %s89
      %p101 = scmp.eq.s32.totalorder %s37, 1
      %p102 = por %p100, %p101
      %p104 = scmp.ne.s32.totalorder %s89, %s103
      %p105 = scmp.eq.s32.totalorder %s37, 0
      %p106 = por %p104, %p105
      %s108 = sadd.s32 %s107, 1
      %p111 = scmp.eq.s32.totalorder %s31, 1
      %p112 = scmp.ne.s32.totalorder %s107, %s109
      %p113 = scmp.eq.s32.totalorder %s31, 0
      %p114 = por %p112, %p113
      %p115 = scmp.ne.s32.totalorder %s107, %s109
      %p116 = scmp.eq.s32.totalorder %s36, 1
      %p117 = por %p115, %p116
      %p118 = scmp.ne.s32.totalorder %s109, %s110
      %p119 = scmp.eq.s32.totalorder %s36, 0
      %p120 = por %p118, %p119
      %p121 = scmp.ne.s32.totalorder %s109, %s110
      %p122 = scmp.eq.s32.totalorder %s37, 1
      %p123 = por %p121, %p122
      %p125 = scmp.ne.s32.totalorder %s110, %s124
      %p126 = scmp.eq.s32.totalorder %s37, 0
      %p127 = por %p125, %p126
      %s129 = sadd.s32 %s128, 1
      %p132 = scmp.eq.s32.totalorder %s31, 1
      %p133 = scmp.ne.s32.totalorder %s128, %s130
      %p134 = scmp.eq.s32.totalorder %s31, 0
      %p135 = por %p133, %p134
      %p136 = scmp.ne.s32.totalorder %s128, %s130
      %p137 = scmp.eq.s32.totalorder %s36, 1
      %p138 = por %p136, %p137
      %p139 = scmp.ne.s32.totalorder %s130, %s131
      %p140 = scmp.eq.s32.totalorder %s36, 0
      %p141 = por %p139, %p140
      %p142 = scmp.ne.s32.totalorder %s130, %s131
      %p143 = scmp.eq.s32.totalorder %s37, 1
      %p144 = por %p142, %p143
      %p146 = scmp.ne.s32.totalorder %s131, %s145
      %p147 = scmp.eq.s32.totalorder %s37, 0
      %p148 = por %p146, %p147
      %s150 = sadd.s32 %s149, 1
      %p153 = scmp.eq.s32.totalorder %s31, 1
      %p154 = scmp.ne.s32.totalorder %s149, %s151
      %p155 = scmp.eq.s32.totalorder %s31, 0
      %p156 = por %p154, %p155
      %p157 = scmp.ne.s32.totalorder %s149, %s151
      %p158 = scmp.eq.s32.totalorder %s36, 1
      %p159 = por %p157, %p158
      %p160 = scmp.ne.s32.totalorder %s151, %s152
      %p161 = scmp.eq.s32.totalorder %s36, 0
      %p162 = por %p160, %p161
      %p163 = scmp.ne.s32.totalorder %s151, %s152
      %p164 = scmp.eq.s32.totalorder %s37, 1
      %p165 = por %p163, %p164
      %p167 = scmp.ne.s32.totalorder %s152, %s166
      %p168 = scmp.eq.s32.totalorder %s37, 0
      %p169 = por %p167, %p168
      %s171 = sadd.s32 %s170, 1
      %p174 = scmp.eq.s32.totalorder %s31, 1
      %p175 = scmp.ne.s32.totalorder %s170, %s172
      %p176 = scmp.eq.s32.totalorder %s31, 0
      %p177 = por %p175, %p176
      %p178 = scmp.ne.s32.totalorder %s170, %s172
      %p179 = scmp.eq.s32.totalorder %s36, 1
      %p180 = por %p178, %p179
      %p181 = scmp.ne.s32.totalorder %s172, %s173
      %p182 = scmp.eq.s32.totalorder %s36, 0
      %p183 = por %p181, %p182
      %p184 = scmp.ne.s32.totalorder %s172, %s173
      %p185 = scmp.eq.s32.totalorder %s37, 1
      %p186 = por %p184, %p185
      %p188 = scmp.ne.s32.totalorder %s173, %s187
      %p189 = scmp.eq.s32.totalorder %s37, 0
      %p190 = por %p188, %p189
      %s192 = sadd.s32 %s191, 1
      %p195 = scmp.eq.s32.totalorder %s31, 1
      %p196 = scmp.ne.s32.totalorder %s191, %s193
      %p197 = scmp.eq.s32.totalorder %s31, 0
      %p198 = por %p196, %p197
      %p199 = scmp.ne.s32.totalorder %s191, %s193
      %p200 = scmp.eq.s32.totalorder %s36, 1
      %p201 = por %p199, %p200
      %p202 = scmp.ne.s32.totalorder %s193, %s194
      %p203 = scmp.eq.s32.totalorder %s36, 0
      %p204 = por %p202, %p203
      %p205 = scmp.ne.s32.totalorder %s193, %s194
      %p206 = scmp.eq.s32.totalorder %s37, 1
      %p207 = por %p205, %p206
      %p209 = scmp.ne.s32.totalorder %s194, %s208
      %p210 = scmp.eq.s32.totalorder %s37, 0
      %p211 = por %p209, %p210
      %s213 = sadd.s32 %s212, 1
      %p216 = scmp.eq.s32.totalorder %s31, 1
      %p217 = scmp.ne.s32.totalorder %s212, %s214
      %p218 = scmp.eq.s32.totalorder %s31, 0
      %p219 = por %p217, %p218
      %p220 = scmp.ne.s32.totalorder %s212, %s214
      %p221 = scmp.eq.s32.totalorder %s36, 1
      %p222 = por %p220, %p221
      %p223 = scmp.ne.s32.totalorder %s214, %s215
      %p224 = scmp.eq.s32.totalorder %s36, 0
      %p225 = por %p223, %p224
      %p226 = scmp.ne.s32.totalorder %s214, %s215
      %p227 = scmp.eq.s32.totalorder %s37, 1
      %p228 = por %p226, %p227
      %p230 = scmp.ne.s32.totalorder %s215, %s229
      %p231 = scmp.eq.s32.totalorder %s37, 0
      %p232 = por %p230, %p231
      %s234 = sadd.s32 %s233, 1
      %p237 = scmp.eq.s32.totalorder %s31, 1
      %p238 = scmp.ne.s32.totalorder %s233, %s235
      %p239 = scmp.eq.s32.totalorder %s31, 0
      %p240 = por %p238, %p239
      %p241 = scmp.ne.s32.totalorder %s233, %s235
      %p242 = scmp.eq.s32.totalorder %s36, 1
      %p243 = por %p241, %p242
      %p244 = scmp.ne.s32.totalorder %s235, %s236
      %p245 = scmp.eq.s32.totalorder %s36, 0
      %p246 = por %p244, %p245
      %p247 = scmp.ne.s32.totalorder %s235, %s236
      %p248 = scmp.eq.s32.totalorder %s37, 1
      %p249 = por %p247, %p248
      %p251 = scmp.ne.s32.totalorder %s236, %s250
      %p252 = scmp.eq.s32.totalorder %s37, 0
      %p253 = por %p251, %p252
      %s255 = sadd.s32 %s254, 1
      %p258 = scmp.eq.s32.totalorder %s31, 1
      %p259 = scmp.ne.s32.totalorder %s254, %s256
      %p260 = scmp.eq.s32.totalorder %s31, 0
      %p261 = por %p259, %p260
      %p262 = scmp.ne.s32.totalorder %s254, %s256
      %p263 = scmp.eq.s32.totalorder %s36, 1
      %p264 = por %p262, %p263
      %p265 = scmp.ne.s32.totalorder %s256, %s257
      %p266 = scmp.eq.s32.totalorder %s36, 0
      %p267 = por %p265, %p266
      %p268 = scmp.ne.s32.totalorder %s256, %s257
      %p269 = scmp.eq.s32.totalorder %s37, 1
      %p270 = por %p268, %p269
      %p272 = scmp.ne.s32.totalorder %s257, %s271
      %p273 = scmp.eq.s32.totalorder %s37, 0
      %p274 = por %p272, %p273
      %s276 = sadd.s32 %s275, 1
      %p279 = scmp.eq.s32.totalorder %s31, 1
      %p280 = scmp.ne.s32.totalorder %s275, %s277
      %p281 = scmp.eq.s32.totalorder %s31, 0
      %p282 = por %p280, %p281
      %p283 = scmp.ne.s32.totalorder %s275, %s277
      %p284 = scmp.eq.s32.totalorder %s36, 1
      %p285 = por %p283, %p284
      %p286 = scmp.ne.s32.totalorder %s277, %s278
      %p287 = scmp.eq.s32.totalorder %s36, 0
      %p288 = por %p286, %p287
      %p289 = scmp.ne.s32.totalorder %s277, %s278
      %p290 = scmp.eq.s32.totalorder %s37, 1
      %p291 = por %p289, %p290
      %p293 = scmp.ne.s32.totalorder %s278, %s292
      %p294 = scmp.eq.s32.totalorder %s37, 0
      %p295 = por %p293, %p294
      %s297 = sadd.s32 %s296, 1
      %p300 = scmp.eq.s32.totalorder %s31, 1
      %p301 = scmp.ne.s32.totalorder %s296, %s298
      %p302 = scmp.eq.s32.totalorder %s31, 0
      %p303 = por %p301, %p302
      %p304 = scmp.ne.s32.totalorder %s296, %s298
      %p305 = scmp.eq.s32.totalorder %s36, 1
      %p306 = por %p304, %p305
      %p307 = scmp.ne.s32.totalorder %s298, %s299
      %p308 = scmp.eq.s32.totalorder %s36, 0
      %p309 = por %p307, %p308
      %p310 = scmp.ne.s32.totalorder %s298, %s299
      %p311 = scmp.eq.s32.totalorder %s37, 1
      %p312 = por %p310, %p311
      %p314 = scmp.ne.s32.totalorder %s299, %s313
      %p315 = scmp.eq.s32.totalorder %s37, 0
      %p316 = por %p314, %p315
      %s318 = sadd.s32 %s317, 1
      %p321 = scmp.eq.s32.totalorder %s31, 1
      %p322 = scmp.ne.s32.totalorder %s317, %s319
      %p323 = scmp.eq.s32.totalorder %s31, 0
      %p324 = por %p322, %p323
      %p325 = scmp.ne.s32.totalorder %s317, %s319
      %p326 = scmp.eq.s32.totalorder %s36, 1
      %p327 = por %p325, %p326
      %p328 = scmp.ne.s32.totalorder %s319, %s320
      %p329 = scmp.eq.s32.totalorder %s36, 0
      %p330 = por %p328, %p329
      %p331 = scmp.ne.s32.totalorder %s319, %s320
      %p332 = scmp.eq.s32.totalorder %s37, 1
      %p333 = por %p331, %p332
      %p335 = scmp.ne.s32.totalorder %s320, %s334
      %p336 = scmp.eq.s32.totalorder %s37, 0
      %p337 = por %p335, %p336
      %s339 = sadd.s32 %s338, 1
      %p342 = scmp.eq.s32.totalorder %s31, 1
      %p343 = scmp.ne.s32.totalorder %s338, %s340
      %p344 = scmp.eq.s32.totalorder %s31, 0
      %p345 = por %p343, %p344
      %p346 = scmp.ne.s32.totalorder %s338, %s340
      %p347 = scmp.eq.s32.totalorder %s36, 1
      %p348 = por %p346, %p347
      %p349 = scmp.ne.s32.totalorder %s340, %s341
      %p350 = scmp.eq.s32.totalorder %s36, 0
      %p351 = por %p349, %p350
      %p352 = scmp.ne.s32.totalorder %s340, %s341
      %p353 = scmp.eq.s32.totalorder %s37, 1
      %p354 = por %p352, %p353
      %p356 = scmp.ne.s32.totalorder %s341, %s355
      %p357 = scmp.eq.s32.totalorder %s37, 0
      %p358 = por %p356, %p357
      %s359 = ssub.s32 %s31, %s38
      %p360 = scmp.eq.s32.totalorder %s359, 0
      %s362 = sadd.s32 %s361, 1
      %s363 = scalar_select %p360, %s361, %s362
      %p366 = pneg %p360
      %p367 = scmp.eq.s32.totalorder %s31, 1
      %p368 = por %p366, %p367
      %p369 = scmp.ne.s32.totalorder %s361, %s364
      %p370 = scmp.eq.s32.totalorder %s31, 0
      %p371 = por %p369, %p370
      %p372 = scmp.ne.s32.totalorder %s361, %s364
      %p373 = scmp.eq.s32.totalorder %s36, 1
      %p374 = por %p372, %p373
      %p375 = scmp.ne.s32.totalorder %s364, %s365
      %p376 = scmp.eq.s32.totalorder %s36, 0
      %p377 = por %p375, %p376
      %p378 = scmp.ne.s32.totalorder %s364, %s365
      %p379 = scmp.eq.s32.totalorder %s37, 1
      %p380 = por %p378, %p379
      %p382 = scmp.ne.s32.totalorder %s365, %s381
      %p383 = scmp.eq.s32.totalorder %s37, 0
      %p384 = por %p382, %p383
      %p385 = scmp.le.s32.totalorder 1, %s31
      %p386 = scmp.lt.s32.totalorder %s31, 3
      %p387 = pnand %p385, %p386
      %p388 = pneg %p387
      // Predicated region
      $region9: #{autoencoder_forward.1} parent=5 // pred_check
        _
      $region10: #{autoencoder_forward.1} parent=5 // pred_check_branch
        %390 = sbr.rel (%p387) target = $region12
      $region11: #{autoencoder_forward.1} parent=5 // pred_region
        %s391 = ssub.s32 %s31, 1
        // Predicated region
        $region13: #{autoencoder_forward.1} parent=11 // pred_check
          %p392 = pneg %p78
        $region14: #{autoencoder_forward.1} parent=11 // pred_check_branch
          %394 = sbr.rel (%p392) target = $region16
        $region15: #{autoencoder_forward.1} parent=11 // pred_region
          %s396 = ssub.s32 8192, 8192
          %397 = vsyncadd [#allocation6], %s396
          %s398 = sshll.u32 [#allocation5], 4
          %s399 = int_to_ptr.vmem [resolvable:$true] %s398
          %404 = dma.hbm_to_vmem [thread:$0]  %s1, 8192, %s399, [#allocation6], 256, 256, 16
        $region16: #{autoencoder_forward.1} parent=11 // pred_fallthru
          _
        // Predicated region
        $region17: #{autoencoder_forward.1} parent=11 // pred_check
          %p405 = pneg %p99
        $region18: #{autoencoder_forward.1} parent=11 // pred_check_branch
          %407 = sbr.rel (%p405) target = $region20
        $region19: #{autoencoder_forward.1} parent=11 // pred_region
          _
        $region20: #{autoencoder_forward.1} parent=11 // pred_fallthru
          _
        // Predicated region
        $region21: #{autoencoder_forward.1} parent=11 // pred_check
          %p408 = pneg %p120
        $region22: #{autoencoder_forward.1} parent=11 // pred_check_branch
          %410 = sbr.rel (%p408) target = $region24
        $region23: #{autoencoder_forward.1} parent=11 // pred_region
          %s412 = ssub.s32 4096, 4096
          %413 = vsyncadd [#allocation6], %s412
          %s414 = sshll.u32 [#allocation7], 4
          %s415 = int_to_ptr.vmem [resolvable:$true] %s414
          %420 = dma.hbm_to_vmem [thread:$0]  %s3, 4096, %s415, [#allocation6], 128, 128, 8
        $region24: #{autoencoder_forward.1} parent=11 // pred_fallthru
          _
        // Predicated region
        $region25: #{autoencoder_forward.1} parent=11 // pred_check
          %p421 = pneg %p141
        $region26: #{autoencoder_forward.1} parent=11 // pred_check_branch
          %423 = sbr.rel (%p421) target = $region28
        $region27: #{autoencoder_forward.1} parent=11 // pred_region
          _
        $region28: #{autoencoder_forward.1} parent=11 // pred_fallthru
          _
        // Predicated region
        $region29: #{autoencoder_forward.1} parent=11 // pred_check
          %p424 = pneg %p162
        $region30: #{autoencoder_forward.1} parent=11 // pred_check_branch
          %426 = sbr.rel (%p424) target = $region32
        $region31: #{autoencoder_forward.1} parent=11 // pred_region
          %s428 = ssub.s32 2048, 2048
          %429 = vsyncadd [#allocation9], %s428
          %s430 = sshll.u32 [#allocation8], 4
          %s431 = int_to_ptr.vmem [resolvable:$true] %s430
          %436 = dma.hbm_to_vmem [thread:$0]  %s5, 2048, %s431, [#allocation9], 128, 128, 8
        $region32: #{autoencoder_forward.1} parent=11 // pred_fallthru
          _
        // Predicated region
        $region33: #{autoencoder_forward.1} parent=11 // pred_check
          %p437 = pneg %p183
        $region34: #{autoencoder_forward.1} parent=11 // pred_check_branch
          %439 = sbr.rel (%p437) target = $region36
        $region35: #{autoencoder_forward.1} parent=11 // pred_region
          _
        $region36: #{autoencoder_forward.1} parent=11 // pred_fallthru
          _
        // Predicated region
        $region37: #{autoencoder_forward.1} parent=11 // pred_check
          %p440 = pneg %p204
        $region38: #{autoencoder_forward.1} parent=11 // pred_check_branch
          %442 = sbr.rel (%p440) target = $region40
        $region39: #{autoencoder_forward.1} parent=11 // pred_region
          %s444 = ssub.s32 2048, 2048
          %445 = vsyncadd [#allocation9], %s444
          %s446 = sshll.u32 [#allocation10], 4
          %s447 = int_to_ptr.vmem [resolvable:$true] %s446
          %452 = dma.hbm_to_vmem [thread:$0]  %s7, 2048, %s447, [#allocation9], 128, 128, 8
        $region40: #{autoencoder_forward.1} parent=11 // pred_fallthru
          _
        // Predicated region
        $region41: #{autoencoder_forward.1} parent=11 // pred_check
          %p453 = pneg %p225
        $region42: #{autoencoder_forward.1} parent=11 // pred_check_branch
          %455 = sbr.rel (%p453) target = $region44
        $region43: #{autoencoder_forward.1} parent=11 // pred_region
          _
        $region44: #{autoencoder_forward.1} parent=11 // pred_fallthru
          _
        // Predicated region
        $region45: #{autoencoder_forward.1} parent=11 // pred_check
          %p456 = pneg %p246
        $region46: #{autoencoder_forward.1} parent=11 // pred_check_branch
          %458 = sbr.rel (%p456) target = $region48
        $region47: #{autoencoder_forward.1} parent=11 // pred_region
          %s460 = ssub.s32 2048, 2048
          %461 = vsyncadd [#allocation12], %s460
          %s462 = sshll.u32 [#allocation11], 4
          %s463 = int_to_ptr.vmem [resolvable:$true] %s462
          %468 = dma.hbm_to_vmem [thread:$0]  %s9, 2048, %s463, [#allocation12], 128, 128, 8
        $region48: #{autoencoder_forward.1} parent=11 // pred_fallthru
          _
        // Predicated region
        $region49: #{autoencoder_forward.1} parent=11 // pred_check
          %p469 = pneg %p267
        $region50: #{autoencoder_forward.1} parent=11 // pred_check_branch
          %471 = sbr.rel (%p469) target = $region52
        $region51: #{autoencoder_forward.1} parent=11 // pred_region
          _
        $region52: #{autoencoder_forward.1} parent=11 // pred_fallthru
          _
        // Predicated region
        $region53: #{autoencoder_forward.1} parent=11 // pred_check
          %p472 = pneg %p288
        $region54: #{autoencoder_forward.1} parent=11 // pred_check_branch
          %474 = sbr.rel (%p472) target = $region56
        $region55: #{autoencoder_forward.1} parent=11 // pred_region
          %s476 = ssub.s32 4096, 4096
          %477 = vsyncadd [#allocation12], %s476
          %s478 = sshll.u32 [#allocation13], 4
          %s479 = int_to_ptr.vmem [resolvable:$true] %s478
          %484 = dma.hbm_to_vmem [thread:$0]  %s11, 4096, %s479, [#allocation12], 256, 256, 16
        $region56: #{autoencoder_forward.1} parent=11 // pred_fallthru
          _
        // Predicated region
        $region57: #{autoencoder_forward.1} parent=11 // pred_check
          %p485 = pneg %p309
        $region58: #{autoencoder_forward.1} parent=11 // pred_check_branch
          %487 = sbr.rel (%p485) target = $region60
        $region59: #{autoencoder_forward.1} parent=11 // pred_region
          _
        $region60: #{autoencoder_forward.1} parent=11 // pred_fallthru
          _
        // Predicated region
        $region61: #{autoencoder_forward.1} parent=11 // pred_check
          %p488 = pneg %p330
        $region62: #{autoencoder_forward.1} parent=11 // pred_check_branch
          %490 = sbr.rel (%p488) target = $region64
        $region63: #{autoencoder_forward.1} parent=11 // pred_region
          %s492 = ssub.s32 8192, 8192
          %493 = vsyncadd [#allocation15], %s492
          %s494 = sshll.u32 [#allocation14], 4
          %s495 = int_to_ptr.vmem [resolvable:$true] %s494
          %500 = dma.hbm_to_vmem [thread:$0]  %s13, 8192, %s495, [#allocation15], 256, 256, 16
        $region64: #{autoencoder_forward.1} parent=11 // pred_fallthru
          _
        // Predicated region
        $region65: #{autoencoder_forward.1} parent=11 // pred_check
          %p501 = pneg %p351
        $region66: #{autoencoder_forward.1} parent=11 // pred_check_branch
          %503 = sbr.rel (%p501) target = $region68
        $region67: #{autoencoder_forward.1} parent=11 // pred_region
          _
        $region68: #{autoencoder_forward.1} parent=11 // pred_fallthru
          _
      $region12: #{autoencoder_forward.1} parent=5 // pred_fallthru
        _
      %p504 = scmp.lt.s32.totalorder %s31, 2
      // Predicated region
      $region69: #{autoencoder_forward.1} parent=5 // pred_check
        %p505 = pneg %p504
      $region70: #{autoencoder_forward.1} parent=5 // pred_check_branch
        %507 = sbr.rel (%p505) target = $region72
      $region71: #{autoencoder_forward.1} parent=5 // pred_region
        // Predicated region
        $region73: #{autoencoder_forward.1} parent=71 // pred_check
          %p508 = pneg %p51
        $region74: #{autoencoder_forward.1} parent=71 // pred_check_branch
          %510 = sbr.rel (%p508) target = $region76
        $region75: #{autoencoder_forward.1} parent=71 // pred_region
          %s511 = sand.u32 %s41, 1
          %s512 = scalar_lea.sflag [#allocation3], %s511
          %s513 = sand.u32 %s41, 1
          %s514 = smul.addr %s513, 16
          %s515 = scalar_lea.vmem [#allocation2], %s514
          %s517 = ssub.s32 256, 256
          %518 = vsyncadd %s512, %s517
          %s519 = smul.addr %s31, 2
          %s520 = smul.addr %s519, 128
          %s521 = scalar_lea.hbm %s0, %s520
          %s523 = sshll.u32 %s515, 4
          %s524 = int_to_ptr.vmem [resolvable:$true] %s523
          %526 = dma.hbm_to_vmem [thread:$0]  %s521, 256, %s524, %s512
        $region76: #{autoencoder_forward.1} parent=71 // pred_fallthru
          _
      $region72: #{autoencoder_forward.1} parent=5 // pred_fallthru
        _
      %p527 = scmp.le.s32.totalorder 1, %s31
      %p528 = scmp.lt.s32.totalorder %s31, 3
      %p529 = pnand %p527, %p528
      %p530 = pneg %p529
      // Predicated region
      $region77: #{autoencoder_forward.1} parent=5 // pred_check
        _
      $region78: #{autoencoder_forward.1} parent=5 // pred_check_branch
        %532 = sbr.rel (%p529) target = $region80
      $region79: #{autoencoder_forward.1} parent=5 // pred_region
        %s533 = ssub.s32 %s31, 1
        %s534 = sand.u32 %s44, 1
        %s535 = scalar_lea.sflag [#allocation3], %s534
        %s536 = sand.u32 %s44, 1
        %s537 = smul.addr %s536, 16
        %s538 = scalar_lea.vmem [#allocation2], %s537
        // Predicated region
        $region81: #{autoencoder_forward.1} parent=79 // pred_check
          %p539 = pneg %p57
        $region82: #{autoencoder_forward.1} parent=79 // pred_check_branch
          %541 = sbr.rel (%p539) target = $region84
        $region83: #{autoencoder_forward.1} parent=79 // pred_region
          %542 = dma.done %s535, 256
        $region84: #{autoencoder_forward.1} parent=79 // pred_fallthru
          _
        // Predicated region
        $region85: #{autoencoder_forward.1} parent=79 // pred_check
          %p543 = pneg %p78
        $region86: #{autoencoder_forward.1} parent=79 // pred_check_branch
          %545 = sbr.rel (%p543) target = $region88
        $region87: #{autoencoder_forward.1} parent=79 // pred_region
          %546 = dma.done [#allocation6], 8192
        $region88: #{autoencoder_forward.1} parent=79 // pred_fallthru
          _
        // Predicated region
        $region89: #{autoencoder_forward.1} parent=79 // pred_check
          %p547 = pneg %p120
        $region90: #{autoencoder_forward.1} parent=79 // pred_check_branch
          %549 = sbr.rel (%p547) target = $region92
        $region91: #{autoencoder_forward.1} parent=79 // pred_region
          %550 = dma.done [#allocation6], 4096
        $region92: #{autoencoder_forward.1} parent=79 // pred_fallthru
          _
        // Predicated region
        $region93: #{autoencoder_forward.1} parent=79 // pred_check
          %p551 = pneg %p162
        $region94: #{autoencoder_forward.1} parent=79 // pred_check_branch
          %553 = sbr.rel (%p551) target = $region96
        $region95: #{autoencoder_forward.1} parent=79 // pred_region
          %554 = dma.done [#allocation9], 2048
        $region96: #{autoencoder_forward.1} parent=79 // pred_fallthru
          _
        // Predicated region
        $region97: #{autoencoder_forward.1} parent=79 // pred_check
          %p555 = pneg %p204
        $region98: #{autoencoder_forward.1} parent=79 // pred_check_branch
          %557 = sbr.rel (%p555) target = $region100
        $region99: #{autoencoder_forward.1} parent=79 // pred_region
          %558 = dma.done [#allocation9], 2048
        $region100: #{autoencoder_forward.1} parent=79 // pred_fallthru
          _
        // Predicated region
        $region101: #{autoencoder_forward.1} parent=79 // pred_check
          %p559 = pneg %p246
        $region102: #{autoencoder_forward.1} parent=79 // pred_check_branch
          %561 = sbr.rel (%p559) target = $region104
        $region103: #{autoencoder_forward.1} parent=79 // pred_region
          %562 = dma.done [#allocation12], 2048
        $region104: #{autoencoder_forward.1} parent=79 // pred_fallthru
          _
        // Predicated region
        $region105: #{autoencoder_forward.1} parent=79 // pred_check
          %p563 = pneg %p288
        $region106: #{autoencoder_forward.1} parent=79 // pred_check_branch
          %565 = sbr.rel (%p563) target = $region108
        $region107: #{autoencoder_forward.1} parent=79 // pred_region
          %566 = dma.done [#allocation12], 4096
        $region108: #{autoencoder_forward.1} parent=79 // pred_fallthru
          _
        // Predicated region
        $region109: #{autoencoder_forward.1} parent=79 // pred_check
          %p567 = pneg %p330
        $region110: #{autoencoder_forward.1} parent=79 // pred_check_branch
          %569 = sbr.rel (%p567) target = $region112
        $region111: #{autoencoder_forward.1} parent=79 // pred_region
          %570 = dma.done [#allocation15], 8192
        $region112: #{autoencoder_forward.1} parent=79 // pred_fallthru
          _
        %s571 = sand.u32 %s44, 1
        %s572 = scalar_lea.sflag [#allocation3], %s571
        %s573 = sand.u32 %s44, 1
        %s574 = smul.addr %s573, 16
        %s575 = scalar_lea.vmem [#allocation2], %s574
        %p576 = pneg %p57
        %p577 = pneg %p54
        %p578 = pneg %p78
        %p579 = pneg %p75
        %p580 = pneg %p99
        %p581 = pneg %p96
        %p582 = pneg %p120
        %p583 = pneg %p117
        %p584 = pneg %p141
        %p585 = pneg %p138
        %p586 = pneg %p162
        %p587 = pneg %p159
        %p588 = pneg %p183
        %p589 = pneg %p180
        %p590 = pneg %p204
        %p591 = pneg %p201
        %p592 = pneg %p225
        %p593 = pneg %p222
        %p594 = pneg %p246
        %p595 = pneg %p243
        %p596 = pneg %p267
        %p597 = pneg %p264
        %p598 = pneg %p288
        %p599 = pneg %p285
        %p600 = pneg %p309
        %p601 = pneg %p306
        %p602 = pneg %p330
        %p603 = pneg %p327
        %p604 = pneg %p351
        %p605 = pneg %p348
        %p606 = pneg %p377
        %p607 = pneg %p374
        %s608 = sand.u32 %s364, 1
        %s609 = scalar_lea.sflag [#allocation4], %s608
        %s610 = sand.u32 %s364, 1
        %s611 = smul.addr %s610, 16
        %s612 = scalar_lea.vmem [#allocation16], %s611
        %v613 = vld [vmem:[%s538] sm:$0xff]
        %v614 = vld [vmem:[%s538 + $0x8] sm:$0xff]
        %v615 = vld [vmem:[#allocation5] sm:$0xff]
        %v616 = vld [vmem:[#allocation5 + $0x8] sm:$0xff]
        %v617 = vld [vmem:[#allocation5 + $0x10] sm:$0xff]
        %v618 = vld [vmem:[#allocation5 + $0x18] sm:$0xff]
        %v619 = vld [vmem:[#allocation5 + $0x20] sm:$0xff]
        %v620 = vld [vmem:[#allocation5 + $0x28] sm:$0xff]
        %v621 = vld [vmem:[#allocation5 + $0x30] sm:$0xff]
        %v622 = vld [vmem:[#allocation5 + $0x38] sm:$0xff]
        %v623 = vld [vmem:[#allocation5 + $0x40] sm:$0xff]
        %v624 = vld [vmem:[#allocation5 + $0x48] sm:$0xff]
        %v625 = vld [vmem:[#allocation5 + $0x50] sm:$0xff]
        %v626 = vld [vmem:[#allocation5 + $0x58] sm:$0xff]
        %v627 = vld [vmem:[#allocation5 + $0x60] sm:$0xff]
        %v628 = vld [vmem:[#allocation5 + $0x68] sm:$0xff]
        %v629 = vld [vmem:[#allocation5 + $0x70] sm:$0xff]
        %v630 = vld [vmem:[#allocation5 + $0x78] sm:$0xff]
        %v631 = vld [vmem:[#allocation5 + $0x80] sm:$0xff]
        %v632 = vld [vmem:[#allocation5 + $0x88] sm:$0xff]
        %v633 = vld [vmem:[#allocation5 + $0x90] sm:$0xff]
        %v634 = vld [vmem:[#allocation5 + $0x98] sm:$0xff]
        %v635 = vld [vmem:[#allocation5 + $0xa0] sm:$0xff]
        %v636 = vld [vmem:[#allocation5 + $0xa8] sm:$0xff]
        %v637 = vld [vmem:[#allocation5 + $0xb0] sm:$0xff]
        %v638 = vld [vmem:[#allocation5 + $0xb8] sm:$0xff]
        %v639 = vld [vmem:[#allocation5 + $0xc0] sm:$0xff]
        %v640 = vld [vmem:[#allocation5 + $0xc8] sm:$0xff]
        %v641 = vld [vmem:[#allocation5 + $0xd0] sm:$0xff]
        %v642 = vld [vmem:[#allocation5 + $0xd8] sm:$0xff]
        %v643 = vld [vmem:[#allocation5 + $0xe0] sm:$0xff]
        %v644 = vld [vmem:[#allocation5 + $0xe8] sm:$0xff]
        %v645 = vld [vmem:[#allocation5 + $0xf0] sm:$0xff]
        %v646 = vld [vmem:[#allocation5 + $0xf8] sm:$0xff]
        %v647 = vld [vmem:[#allocation5 + $0x100] sm:$0xff]
        %v648 = vld [vmem:[#allocation5 + $0x108] sm:$0xff]
        %v649 = vld [vmem:[#allocation5 + $0x110] sm:$0xff]
        %v650 = vld [vmem:[#allocation5 + $0x118] sm:$0xff]
        %v651 = vld [vmem:[#allocation5 + $0x120] sm:$0xff]
        %v652 = vld [vmem:[#allocation5 + $0x128] sm:$0xff]
        %v653 = vld [vmem:[#allocation5 + $0x130] sm:$0xff]
        %v654 = vld [vmem:[#allocation5 + $0x138] sm:$0xff]
        %v655 = vld [vmem:[#allocation5 + $0x140] sm:$0xff]
        %v656 = vld [vmem:[#allocation5 + $0x148] sm:$0xff]
        %v657 = vld [vmem:[#allocation5 + $0x150] sm:$0xff]
        %v658 = vld [vmem:[#allocation5 + $0x158] sm:$0xff]
        %v659 = vld [vmem:[#allocation5 + $0x160] sm:$0xff]
        %v660 = vld [vmem:[#allocation5 + $0x168] sm:$0xff]
        %v661 = vld [vmem:[#allocation5 + $0x170] sm:$0xff]
        %v662 = vld [vmem:[#allocation5 + $0x178] sm:$0xff]
        %v663 = vld [vmem:[#allocation5 + $0x180] sm:$0xff]
        %v664 = vld [vmem:[#allocation5 + $0x188] sm:$0xff]
        %v665 = vld [vmem:[#allocation5 + $0x190] sm:$0xff]
        %v666 = vld [vmem:[#allocation5 + $0x198] sm:$0xff]
        %v667 = vld [vmem:[#allocation5 + $0x1a0] sm:$0xff]
        %v668 = vld [vmem:[#allocation5 + $0x1a8] sm:$0xff]
        %v669 = vld [vmem:[#allocation5 + $0x1b0] sm:$0xff]
        %v670 = vld [vmem:[#allocation5 + $0x1b8] sm:$0xff]
        %v671 = vld [vmem:[#allocation5 + $0x1c0] sm:$0xff]
        %v672 = vld [vmem:[#allocation5 + $0x1c8] sm:$0xff]
        %v673 = vld [vmem:[#allocation5 + $0x1d0] sm:$0xff]
        %v674 = vld [vmem:[#allocation5 + $0x1d8] sm:$0xff]
        %v675 = vld [vmem:[#allocation5 + $0x1e0] sm:$0xff]
        %v676 = vld [vmem:[#allocation5 + $0x1e8] sm:$0xff]
        %v677 = vld [vmem:[#allocation5 + $0x1f0] sm:$0xff]
        %v678 = vld [vmem:[#allocation5 + $0x1f8] sm:$0xff]
        %v679 = vld [vmem:[%s2] sm:$0x3]
        %v681 = vlaneseq
        %v682 = vshrl.u32 %v681, 7
        %v683 = vsub.s32 0, %v682
        %v684 = vrot.slane %v679, %v683
        %v685 = vlaneseq
        %v686 = vshrl.u32 %v685, 7
        %v687 = vsub.s32 1, %v686
        %v688 = vrot.slane %v679, %v687
        %691 = vmatprep.subr.mxu0 %v616
        %692 = vmatpush1.msra.mxu0 %v615
        %693 = vmatprep.subr.mxu0 %v618
        %694 = vmatpush1.msra.mxu0 %v617
        %695 = vmatprep.subr.mxu0 %v620
        %696 = vmatpush1.msra.mxu0 %v619
        %697 = vmatprep.subr.mxu0 %v622
        %698 = vmatpush1.msra.mxu0 %v621
        %699 = vmatprep.subr.mxu0 %v624
        %700 = vmatpush1.msra.mxu0 %v623
        %701 = vmatprep.subr.mxu0 %v626
        %702 = vmatpush1.msra.mxu0 %v625
        %703 = vmatprep.subr.mxu0 %v628
        %704 = vmatpush1.msra.mxu0 %v627
        %705 = vmatprep.subr.mxu0 %v630
        %706 = vmatpush1.msra.mxu0 %v629
        %707 = vmatprep.subr.mxu0 %v632
        %708 = vmatpush1.msra.mxu0 %v631
        %709 = vmatprep.subr.mxu0 %v634
        %710 = vmatpush1.msra.mxu0 %v633
        %711 = vmatprep.subr.mxu0 %v636
        %712 = vmatpush1.msra.mxu0 %v635
        %713 = vmatprep.subr.mxu0 %v638
        %714 = vmatpush1.msra.mxu0 %v637
        %715 = vmatprep.subr.mxu0 %v640
        %716 = vmatpush1.msra.mxu0 %v639
        %717 = vmatprep.subr.mxu0 %v642
        %718 = vmatpush1.msra.mxu0 %v641
        %719 = vmatprep.subr.mxu0 %v644
        %720 = vmatpush1.msra.mxu0 %v643
        %721 = vmatprep.subr.mxu0 %v646
        %722 = vmatpush1.msra.mxu0 %v645
        %723 = vmatprep.subr.mxu0 %v648
        %724 = vmatpush1.msra.mxu0 %v647
        %725 = vmatprep.subr.mxu0 %v650
        %726 = vmatpush1.msra.mxu0 %v649
        %727 = vmatprep.subr.mxu0 %v652
        %728 = vmatpush1.msra.mxu0 %v651
        %729 = vmatprep.subr.mxu0 %v654
        %730 = vmatpush1.msra.mxu0 %v653
        %731 = vmatprep.subr.mxu0 %v656
        %732 = vmatpush1.msra.mxu0 %v655
        %733 = vmatprep.subr.mxu0 %v658
        %734 = vmatpush1.msra.mxu0 %v657
        %735 = vmatprep.subr.mxu0 %v660
        %736 = vmatpush1.msra.mxu0 %v659
        %737 = vmatprep.subr.mxu0 %v662
        %738 = vmatpush1.msra.mxu0 %v661
        %739 = vmatprep.subr.mxu0 %v664
        %740 = vmatpush1.msra.mxu0 %v663
        %741 = vmatprep.subr.mxu0 %v666
        %742 = vmatpush1.msra.mxu0 %v665
        %743 = vmatprep.subr.mxu0 %v668
        %744 = vmatpush1.msra.mxu0 %v667
        %745 = vmatprep.subr.mxu0 %v670
        %746 = vmatpush1.msra.mxu0 %v669
        %747 = vmatprep.subr.mxu0 %v672
        %748 = vmatpush1.msra.mxu0 %v671
        %749 = vmatprep.subr.mxu0 %v674
        %750 = vmatpush1.msra.mxu0 %v673
        %751 = vmatprep.subr.mxu0 %v676
        %752 = vmatpush1.msra.mxu0 %v675
        %753 = vmatprep.subr.mxu0 %v678
        %754 = vmatpush1.msra.mxu0 %v677
        %755 = vmatprep.mubr.f32.mxu0 %v614
        %756 = vmatmul.mubr.f32.gmra.mrb[0].mxu0 %v613
        %v757 = vpop.f32.mrb[0].mxu0
        %v758 = vadd.f32 %v684, %v757
        %v759 = vpop.f32.mrb[0].mxu0
        %v760 = vadd.f32 %v688, %v759
        %761 = vdwg.mxu0
        %v762 = vmax.f32 %v758, 0.0
        %v763 = vmax.f32 %v760, 0.0
        %v764 = vld [vmem:[#allocation7] sm:$0xff]
        %v765 = vld [vmem:[#allocation7 + $0x8] sm:$0xff]
        %v766 = vld [vmem:[#allocation7 + $0x10] sm:$0xff]
        %v767 = vld [vmem:[#allocation7 + $0x18] sm:$0xff]
        %v768 = vld [vmem:[#allocation7 + $0x20] sm:$0xff]
        %v769 = vld [vmem:[#allocation7 + $0x28] sm:$0xff]
        %v770 = vld [vmem:[#allocation7 + $0x30] sm:$0xff]
        %v771 = vld [vmem:[#allocation7 + $0x38] sm:$0xff]
        %v772 = vld [vmem:[#allocation7 + $0x40] sm:$0xff]
        %v773 = vld [vmem:[#allocation7 + $0x48] sm:$0xff]
        %v774 = vld [vmem:[#allocation7 + $0x50] sm:$0xff]
        %v775 = vld [vmem:[#allocation7 + $0x58] sm:$0xff]
        %v776 = vld [vmem:[#allocation7 + $0x60] sm:$0xff]
        %v777 = vld [vmem:[#allocation7 + $0x68] sm:$0xff]
        %v778 = vld [vmem:[#allocation7 + $0x70] sm:$0xff]
        %v779 = vld [vmem:[#allocation7 + $0x78] sm:$0xff]
        %v780 = vld [vmem:[#allocation7 + $0x80] sm:$0xff]
        %v781 = vld [vmem:[#allocation7 + $0x88] sm:$0xff]
        %v782 = vld [vmem:[#allocation7 + $0x90] sm:$0xff]
        %v783 = vld [vmem:[#allocation7 + $0x98] sm:$0xff]
        %v784 = vld [vmem:[#allocation7 + $0xa0] sm:$0xff]
        %v785 = vld [vmem:[#allocation7 + $0xa8] sm:$0xff]
        %v786 = vld [vmem:[#allocation7 + $0xb0] sm:$0xff]
        %v787 = vld [vmem:[#allocation7 + $0xb8] sm:$0xff]
        %v788 = vld [vmem:[#allocation7 + $0xc0] sm:$0xff]
        %v789 = vld [vmem:[#allocation7 + $0xc8] sm:$0xff]
        %v790 = vld [vmem:[#allocation7 + $0xd0] sm:$0xff]
        %v791 = vld [vmem:[#allocation7 + $0xd8] sm:$0xff]
        %v792 = vld [vmem:[#allocation7 + $0xe0] sm:$0xff]
        %v793 = vld [vmem:[#allocation7 + $0xe8] sm:$0xff]
        %v794 = vld [vmem:[#allocation7 + $0xf0] sm:$0xff]
        %v795 = vld [vmem:[#allocation7 + $0xf8] sm:$0xff]
        %v796 = vld [vmem:[%s4] sm:$0x1]
        %v798 = vlaneseq
        %v799 = vshrl.u32 %v798, 7
        %v800 = vsub.s32 0, %v799
        %v801 = vrot.slane %v796, %v800
        %803 = vmatprep.subr.mxu0 0.0
        %804 = vmatpush1.msra.mxu0 %v764
        %805 = vmatprep.subr.mxu0 0.0
        %806 = vmatpush1.msra.mxu0 %v765
        %807 = vmatprep.subr.mxu0 0.0
        %808 = vmatpush1.msra.mxu0 %v766
        %809 = vmatprep.subr.mxu0 0.0
        %810 = vmatpush1.msra.mxu0 %v767
        %811 = vmatprep.subr.mxu0 0.0
        %812 = vmatpush1.msra.mxu0 %v768
        %813 = vmatprep.subr.mxu0 0.0
        %814 = vmatpush1.msra.mxu0 %v769
        %815 = vmatprep.subr.mxu0 0.0
        %816 = vmatpush1.msra.mxu0 %v770
        %817 = vmatprep.subr.mxu0 0.0
        %818 = vmatpush1.msra.mxu0 %v771
        %819 = vmatprep.subr.mxu0 0.0
        %820 = vmatpush1.msra.mxu0 %v772
        %821 = vmatprep.subr.mxu0 0.0
        %822 = vmatpush1.msra.mxu0 %v773
        %823 = vmatprep.subr.mxu0 0.0
        %824 = vmatpush1.msra.mxu0 %v774
        %825 = vmatprep.subr.mxu0 0.0
        %826 = vmatpush1.msra.mxu0 %v775
        %827 = vmatprep.subr.mxu0 0.0
        %828 = vmatpush1.msra.mxu0 %v776
        %829 = vmatprep.subr.mxu0 0.0
        %830 = vmatpush1.msra.mxu0 %v777
        %831 = vmatprep.subr.mxu0 0.0
        %832 = vmatpush1.msra.mxu0 %v778
        %833 = vmatprep.subr.mxu0 0.0
        %834 = vmatpush1.msra.mxu0 %v779
        %835 = vmatprep.subr.mxu0 0.0
        %836 = vmatpush1.msra.mxu0 %v780
        %837 = vmatprep.subr.mxu0 0.0
        %838 = vmatpush1.msra.mxu0 %v781
        %839 = vmatprep.subr.mxu0 0.0
        %840 = vmatpush1.msra.mxu0 %v782
        %841 = vmatprep.subr.mxu0 0.0
        %842 = vmatpush1.msra.mxu0 %v783
        %843 = vmatprep.subr.mxu0 0.0
        %844 = vmatpush1.msra.mxu0 %v784
        %845 = vmatprep.subr.mxu0 0.0
        %846 = vmatpush1.msra.mxu0 %v785
        %847 = vmatprep.subr.mxu0 0.0
        %848 = vmatpush1.msra.mxu0 %v786
        %849 = vmatprep.subr.mxu0 0.0
        %850 = vmatpush1.msra.mxu0 %v787
        %851 = vmatprep.subr.mxu0 0.0
        %852 = vmatpush1.msra.mxu0 %v788
        %853 = vmatprep.subr.mxu0 0.0
        %854 = vmatpush1.msra.mxu0 %v789
        %855 = vmatprep.subr.mxu0 0.0
        %856 = vmatpush1.msra.mxu0 %v790
        %857 = vmatprep.subr.mxu0 0.0
        %858 = vmatpush1.msra.mxu0 %v791
        %859 = vmatprep.subr.mxu0 0.0
        %860 = vmatpush1.msra.mxu0 %v792
        %861 = vmatprep.subr.mxu0 0.0
        %862 = vmatpush1.msra.mxu0 %v793
        %863 = vmatprep.subr.mxu0 0.0
        %864 = vmatpush1.msra.mxu0 %v794
        %865 = vmatprep.subr.mxu0 0.0
        %866 = vmatpush1.msra.mxu0 %v795
        %867 = vmatprep.mubr.f32.mxu0 %v763
        %868 = vmatmul.mubr.f32.gmra.mrb[0].mxu0 %v762
        %v869 = vpop.f32.mrb[0].mxu0
        %v870 = vadd.f32 %v801, %v869
        %v871 = vpop.f32.mrb[0].mxu0
        %872 = vdwg.mxu0
        %v873 = vmax.f32 %v870, 0.0
        %v874 = vld [vmem:[#allocation8] sm:$0xff]
        %v875 = vld [vmem:[#allocation8 + $0x8] sm:$0xff]
        %v876 = vld [vmem:[#allocation8 + $0x10] sm:$0xff]
        %v877 = vld [vmem:[#allocation8 + $0x18] sm:$0xff]
        %v878 = vld [vmem:[#allocation8 + $0x20] sm:$0xff]
        %v879 = vld [vmem:[#allocation8 + $0x28] sm:$0xff]
        %v880 = vld [vmem:[#allocation8 + $0x30] sm:$0xff]
        %v881 = vld [vmem:[#allocation8 + $0x38] sm:$0xff]
        %v882 = vld [vmem:[#allocation8 + $0x40] sm:$0xff]
        %v883 = vld [vmem:[#allocation8 + $0x48] sm:$0xff]
        %v884 = vld [vmem:[#allocation8 + $0x50] sm:$0xff]
        %v885 = vld [vmem:[#allocation8 + $0x58] sm:$0xff]
        %v886 = vld [vmem:[#allocation8 + $0x60] sm:$0xff]
        %v887 = vld [vmem:[#allocation8 + $0x68] sm:$0xff]
        %v888 = vld [vmem:[#allocation8 + $0x70] sm:$0xff]
        %v889 = vld [vmem:[#allocation8 + $0x78] sm:$0xff]
        %v890 = vld [vmem:[%s6] sm:$0x1]
        %v892 = vlaneseq
        %v893 = vshrl.u32 %v892, 7
        %v894 = vsub.s32 0, %v893
        %v895 = vrot.slane %v890, %v894
        %897 = vmatprep.subr.mxu0 0.0
        %898 = vmatpush1.msra.mxu0 %v874
        %899 = vmatprep.subr.mxu0 0.0
        %900 = vmatpush1.msra.mxu0 %v875
        %901 = vmatprep.subr.mxu0 0.0
        %902 = vmatpush1.msra.mxu0 %v876
        %903 = vmatprep.subr.mxu0 0.0
        %904 = vmatpush1.msra.mxu0 %v877
        %905 = vmatprep.subr.mxu0 0.0
        %906 = vmatpush1.msra.mxu0 %v878
        %907 = vmatprep.subr.mxu0 0.0
        %908 = vmatpush1.msra.mxu0 %v879
        %909 = vmatprep.subr.mxu0 0.0
        %910 = vmatpush1.msra.mxu0 %v880
        %911 = vmatprep.subr.mxu0 0.0
        %912 = vmatpush1.msra.mxu0 %v881
        %913 = vmatprep.subr.mxu0 0.0
        %914 = vmatpush1.msra.mxu0 %v882
        %915 = vmatprep.subr.mxu0 0.0
        %916 = vmatpush1.msra.mxu0 %v883
        %917 = vmatprep.subr.mxu0 0.0
        %918 = vmatpush1.msra.mxu0 %v884
        %919 = vmatprep.subr.mxu0 0.0
        %920 = vmatpush1.msra.mxu0 %v885
        %921 = vmatprep.subr.mxu0 0.0
        %922 = vmatpush1.msra.mxu0 %v886
        %923 = vmatprep.subr.mxu0 0.0
        %924 = vmatpush1.msra.mxu0 %v887
        %925 = vmatprep.subr.mxu0 0.0
        %926 = vmatpush1.msra.mxu0 %v888
        %927 = vmatprep.subr.mxu0 0.0
        %928 = vmatpush1.msra.mxu0 %v889
        %929 = vmatprep.subr.mxu0 0.0
        %930 = vmatpush1.msra.mxu0 0.0
        %931 = vmatprep.subr.mxu0 0.0
        %932 = vmatpush1.msra.mxu0 0.0
        %933 = vmatprep.subr.mxu0 0.0
        %934 = vmatpush1.msra.mxu0 0.0
        %935 = vmatprep.subr.mxu0 0.0
        %936 = vmatpush1.msra.mxu0 0.0
        %937 = vmatprep.subr.mxu0 0.0
        %938 = vmatpush1.msra.mxu0 0.0
        %939 = vmatprep.subr.mxu0 0.0
        %940 = vmatpush1.msra.mxu0 0.0
        %941 = vmatprep.subr.mxu0 0.0
        %942 = vmatpush1.msra.mxu0 0.0
        %943 = vmatprep.subr.mxu0 0.0
        %944 = vmatpush1.msra.mxu0 0.0
        %945 = vmatprep.subr.mxu0 0.0
        %946 = vmatpush1.msra.mxu0 0.0
        %947 = vmatprep.subr.mxu0 0.0
        %948 = vmatpush1.msra.mxu0 0.0
        %949 = vmatprep.subr.mxu0 0.0
        %950 = vmatpush1.msra.mxu0 0.0
        %951 = vmatprep.subr.mxu0 0.0
        %952 = vmatpush1.msra.mxu0 0.0
        %953 = vmatprep.subr.mxu0 0.0
        %954 = vmatpush1.msra.mxu0 0.0
        %955 = vmatprep.subr.mxu0 0.0
        %956 = vmatpush1.msra.mxu0 0.0
        %957 = vmatprep.subr.mxu0 0.0
        %958 = vmatpush1.msra.mxu0 0.0
        %959 = vmatprep.subr.mxu0 0.0
        %960 = vmatpush1.msra.mxu0 0.0
        %961 = vmatprep.mubr.f32.mxu0 0.0
        %962 = vmatmul.mubr.f32.gmra.mrb[0].mxu0 %v873
        %v963 = vpop.f32.mrb[0].mxu0
        %v964 = vadd.f32 %v895, %v963
        %v965 = vpop.f32.mrb[0].mxu0
        %966 = vdwg.mxu0
        %v967 = vmax.f32 %v964, 0.0
        %v968 = vld [vmem:[#allocation10] sm:$0xff]
        %v969 = vld [vmem:[#allocation10 + $0x8] sm:$0xff]
        %v970 = vld [vmem:[#allocation10 + $0x10] sm:$0xff]
        %v971 = vld [vmem:[#allocation10 + $0x18] sm:$0xff]
        %v972 = vld [vmem:[#allocation10 + $0x20] sm:$0xff]
        %v973 = vld [vmem:[#allocation10 + $0x28] sm:$0xff]
        %v974 = vld [vmem:[#allocation10 + $0x30] sm:$0xff]
        %v975 = vld [vmem:[#allocation10 + $0x38] sm:$0xff]
        %v976 = vld [vmem:[#allocation10 + $0x40] sm:$0xff]
        %v977 = vld [vmem:[#allocation10 + $0x48] sm:$0xff]
        %v978 = vld [vmem:[#allocation10 + $0x50] sm:$0xff]
        %v979 = vld [vmem:[#allocation10 + $0x58] sm:$0xff]
        %v980 = vld [vmem:[#allocation10 + $0x60] sm:$0xff]
        %v981 = vld [vmem:[#allocation10 + $0x68] sm:$0xff]
        %v982 = vld [vmem:[#allocation10 + $0x70] sm:$0xff]
        %v983 = vld [vmem:[#allocation10 + $0x78] sm:$0xff]
        %v984 = vld [vmem:[%s8] sm:$0x1]
        %v986 = vlaneseq
        %v987 = vshrl.u32 %v986, 7
        %v988 = vsub.s32 0, %v987
        %v989 = vrot.slane %v984, %v988
        %991 = vmatprep.subr.mxu0 0.0
        %992 = vmatpush1.msra.mxu0 %v968
        %993 = vmatprep.subr.mxu0 0.0
        %994 = vmatpush1.msra.mxu0 %v969
        %995 = vmatprep.subr.mxu0 0.0
        %996 = vmatpush1.msra.mxu0 %v970
        %997 = vmatprep.subr.mxu0 0.0
        %998 = vmatpush1.msra.mxu0 %v971
        %999 = vmatprep.subr.mxu0 0.0
        %1000 = vmatpush1.msra.mxu0 %v972
        %1001 = vmatprep.subr.mxu0 0.0
        %1002 = vmatpush1.msra.mxu0 %v973
        %1003 = vmatprep.subr.mxu0 0.0
        %1004 = vmatpush1.msra.mxu0 %v974
        %1005 = vmatprep.subr.mxu0 0.0
        %1006 = vmatpush1.msra.mxu0 %v975
        %1007 = vmatprep.subr.mxu0 0.0
        %1008 = vmatpush1.msra.mxu0 %v976
        %1009 = vmatprep.subr.mxu0 0.0
        %1010 = vmatpush1.msra.mxu0 %v977
        %1011 = vmatprep.subr.mxu0 0.0
        %1012 = vmatpush1.msra.mxu0 %v978
        %1013 = vmatprep.subr.mxu0 0.0
        %1014 = vmatpush1.msra.mxu0 %v979
        %1015 = vmatprep.subr.mxu0 0.0
        %1016 = vmatpush1.msra.mxu0 %v980
        %1017 = vmatprep.subr.mxu0 0.0
        %1018 = vmatpush1.msra.mxu0 %v981
        %1019 = vmatprep.subr.mxu0 0.0
        %1020 = vmatpush1.msra.mxu0 %v982
        %1021 = vmatprep.subr.mxu0 0.0
        %1022 = vmatpush1.msra.mxu0 %v983
        %1023 = vmatprep.subr.mxu0 0.0
        %1024 = vmatpush1.msra.mxu0 0.0
        %1025 = vmatprep.subr.mxu0 0.0
        %1026 = vmatpush1.msra.mxu0 0.0
        %1027 = vmatprep.subr.mxu0 0.0
        %1028 = vmatpush1.msra.mxu0 0.0
        %1029 = vmatprep.subr.mxu0 0.0
        %1030 = vmatpush1.msra.mxu0 0.0
        %1031 = vmatprep.subr.mxu0 0.0
        %1032 = vmatpush1.msra.mxu0 0.0
        %1033 = vmatprep.subr.mxu0 0.0
        %1034 = vmatpush1.msra.mxu0 0.0
        %1035 = vmatprep.subr.mxu0 0.0
        %1036 = vmatpush1.msra.mxu0 0.0
        %1037 = vmatprep.subr.mxu0 0.0
        %1038 = vmatpush1.msra.mxu0 0.0
        %1039 = vmatprep.subr.mxu0 0.0
        %1040 = vmatpush1.msra.mxu0 0.0
        %1041 = vmatprep.subr.mxu0 0.0
        %1042 = vmatpush1.msra.mxu0 0.0
        %1043 = vmatprep.subr.mxu0 0.0
        %1044 = vmatpush1.msra.mxu0 0.0
        %1045 = vmatprep.subr.mxu0 0.0
        %1046 = vmatpush1.msra.mxu0 0.0
        %1047 = vmatprep.subr.mxu0 0.0
        %1048 = vmatpush1.msra.mxu0 0.0
        %1049 = vmatprep.subr.mxu0 0.0
        %1050 = vmatpush1.msra.mxu0 0.0
        %1051 = vmatprep.subr.mxu0 0.0
        %1052 = vmatpush1.msra.mxu0 0.0
        %1053 = vmatprep.subr.mxu0 0.0
        %1054 = vmatpush1.msra.mxu0 0.0
        %1055 = vmatprep.mubr.f32.mxu0 0.0
        %1056 = vmatmul.mubr.f32.gmra.mrb[0].mxu0 %v967
        %v1057 = vpop.f32.mrb[0].mxu0
        %v1058 = vadd.f32 %v989, %v1057
        %v1059 = vpop.f32.mrb[0].mxu0
        %1060 = vdwg.mxu0
        %v1061 = vmax.f32 %v1058, 0.0
        %v1062 = vld [vmem:[#allocation11] sm:$0xff]
        %v1063 = vld [vmem:[#allocation11 + $0x8] sm:$0xff]
        %v1064 = vld [vmem:[#allocation11 + $0x10] sm:$0xff]
        %v1065 = vld [vmem:[#allocation11 + $0x18] sm:$0xff]
        %v1066 = vld [vmem:[#allocation11 + $0x20] sm:$0xff]
        %v1067 = vld [vmem:[#allocation11 + $0x28] sm:$0xff]
        %v1068 = vld [vmem:[#allocation11 + $0x30] sm:$0xff]
        %v1069 = vld [vmem:[#allocation11 + $0x38] sm:$0xff]
        %v1070 = vld [vmem:[#allocation11 + $0x40] sm:$0xff]
        %v1071 = vld [vmem:[#allocation11 + $0x48] sm:$0xff]
        %v1072 = vld [vmem:[#allocation11 + $0x50] sm:$0xff]
        %v1073 = vld [vmem:[#allocation11 + $0x58] sm:$0xff]
        %v1074 = vld [vmem:[#allocation11 + $0x60] sm:$0xff]
        %v1075 = vld [vmem:[#allocation11 + $0x68] sm:$0xff]
        %v1076 = vld [vmem:[#allocation11 + $0x70] sm:$0xff]
        %v1077 = vld [vmem:[#allocation11 + $0x78] sm:$0xff]
        %v1078 = vld [vmem:[%s10] sm:$0x1]
        %v1080 = vlaneseq
        %v1081 = vshrl.u32 %v1080, 7
        %v1082 = vsub.s32 0, %v1081
        %v1083 = vrot.slane %v1078, %v1082
        %1085 = vmatprep.subr.mxu0 0.0
        %1086 = vmatpush1.msra.mxu0 %v1062
        %1087 = vmatprep.subr.mxu0 0.0
        %1088 = vmatpush1.msra.mxu0 %v1063
        %1089 = vmatprep.subr.mxu0 0.0
        %1090 = vmatpush1.msra.mxu0 %v1064
        %1091 = vmatprep.subr.mxu0 0.0
        %1092 = vmatpush1.msra.mxu0 %v1065
        %1093 = vmatprep.subr.mxu0 0.0
        %1094 = vmatpush1.msra.mxu0 %v1066
        %1095 = vmatprep.subr.mxu0 0.0
        %1096 = vmatpush1.msra.mxu0 %v1067
        %1097 = vmatprep.subr.mxu0 0.0
        %1098 = vmatpush1.msra.mxu0 %v1068
        %1099 = vmatprep.subr.mxu0 0.0
        %1100 = vmatpush1.msra.mxu0 %v1069
        %1101 = vmatprep.subr.mxu0 0.0
        %1102 = vmatpush1.msra.mxu0 %v1070
        %1103 = vmatprep.subr.mxu0 0.0
        %1104 = vmatpush1.msra.mxu0 %v1071
        %1105 = vmatprep.subr.mxu0 0.0
        %1106 = vmatpush1.msra.mxu0 %v1072
        %1107 = vmatprep.subr.mxu0 0.0
        %1108 = vmatpush1.msra.mxu0 %v1073
        %1109 = vmatprep.subr.mxu0 0.0
        %1110 = vmatpush1.msra.mxu0 %v1074
        %1111 = vmatprep.subr.mxu0 0.0
        %1112 = vmatpush1.msra.mxu0 %v1075
        %1113 = vmatprep.subr.mxu0 0.0
        %1114 = vmatpush1.msra.mxu0 %v1076
        %1115 = vmatprep.subr.mxu0 0.0
        %1116 = vmatpush1.msra.mxu0 %v1077
        %1117 = vmatprep.subr.mxu0 0.0
        %1118 = vmatpush1.msra.mxu0 0.0
        %1119 = vmatprep.subr.mxu0 0.0
        %1120 = vmatpush1.msra.mxu0 0.0
        %1121 = vmatprep.subr.mxu0 0.0
        %1122 = vmatpush1.msra.mxu0 0.0
        %1123 = vmatprep.subr.mxu0 0.0
        %1124 = vmatpush1.msra.mxu0 0.0
        %1125 = vmatprep.subr.mxu0 0.0
        %1126 = vmatpush1.msra.mxu0 0.0
        %1127 = vmatprep.subr.mxu0 0.0
        %1128 = vmatpush1.msra.mxu0 0.0
        %1129 = vmatprep.subr.mxu0 0.0
        %1130 = vmatpush1.msra.mxu0 0.0
        %1131 = vmatprep.subr.mxu0 0.0
        %1132 = vmatpush1.msra.mxu0 0.0
        %1133 = vmatprep.subr.mxu0 0.0
        %1134 = vmatpush1.msra.mxu0 0.0
        %1135 = vmatprep.subr.mxu0 0.0
        %1136 = vmatpush1.msra.mxu0 0.0
        %1137 = vmatprep.subr.mxu0 0.0
        %1138 = vmatpush1.msra.mxu0 0.0
        %1139 = vmatprep.subr.mxu0 0.0
        %1140 = vmatpush1.msra.mxu0 0.0
        %1141 = vmatprep.subr.mxu0 0.0
        %1142 = vmatpush1.msra.mxu0 0.0
        %1143 = vmatprep.subr.mxu0 0.0
        %1144 = vmatpush1.msra.mxu0 0.0
        %1145 = vmatprep.subr.mxu0 0.0
        %1146 = vmatpush1.msra.mxu0 0.0
        %1147 = vmatprep.subr.mxu0 0.0
        %1148 = vmatpush1.msra.mxu0 0.0
        %1149 = vmatprep.mubr.f32.mxu0 0.0
        %1150 = vmatmul.mubr.f32.gmra.mrb[0].mxu0 %v1061
        %v1151 = vpop.f32.mrb[0].mxu0
        %v1152 = vadd.f32 %v1083, %v1151
        %v1153 = vpop.f32.mrb[0].mxu0
        %1154 = vdwg.mxu0
        %v1155 = vmax.f32 %v1152, 0.0
        %v1156 = vld [vmem:[#allocation13] sm:$0xff]
        %v1157 = vld [vmem:[#allocation13 + $0x8] sm:$0xff]
        %v1158 = vld [vmem:[#allocation13 + $0x10] sm:$0xff]
        %v1159 = vld [vmem:[#allocation13 + $0x18] sm:$0xff]
        %v1160 = vld [vmem:[#allocation13 + $0x20] sm:$0xff]
        %v1161 = vld [vmem:[#allocation13 + $0x28] sm:$0xff]
        %v1162 = vld [vmem:[#allocation13 + $0x30] sm:$0xff]
        %v1163 = vld [vmem:[#allocation13 + $0x38] sm:$0xff]
        %v1164 = vld [vmem:[#allocation13 + $0x40] sm:$0xff]
        %v1165 = vld [vmem:[#allocation13 + $0x48] sm:$0xff]
        %v1166 = vld [vmem:[#allocation13 + $0x50] sm:$0xff]
        %v1167 = vld [vmem:[#allocation13 + $0x58] sm:$0xff]
        %v1168 = vld [vmem:[#allocation13 + $0x60] sm:$0xff]
        %v1169 = vld [vmem:[#allocation13 + $0x68] sm:$0xff]
        %v1170 = vld [vmem:[#allocation13 + $0x70] sm:$0xff]
        %v1171 = vld [vmem:[#allocation13 + $0x78] sm:$0xff]
        %v1172 = vld [vmem:[#allocation13 + $0x80] sm:$0xff]
        %v1173 = vld [vmem:[#allocation13 + $0x88] sm:$0xff]
        %v1174 = vld [vmem:[#allocation13 + $0x90] sm:$0xff]
        %v1175 = vld [vmem:[#allocation13 + $0x98] sm:$0xff]
        %v1176 = vld [vmem:[#allocation13 + $0xa0] sm:$0xff]
        %v1177 = vld [vmem:[#allocation13 + $0xa8] sm:$0xff]
        %v1178 = vld [vmem:[#allocation13 + $0xb0] sm:$0xff]
        %v1179 = vld [vmem:[#allocation13 + $0xb8] sm:$0xff]
        %v1180 = vld [vmem:[#allocation13 + $0xc0] sm:$0xff]
        %v1181 = vld [vmem:[#allocation13 + $0xc8] sm:$0xff]
        %v1182 = vld [vmem:[#allocation13 + $0xd0] sm:$0xff]
        %v1183 = vld [vmem:[#allocation13 + $0xd8] sm:$0xff]
        %v1184 = vld [vmem:[#allocation13 + $0xe0] sm:$0xff]
        %v1185 = vld [vmem:[#allocation13 + $0xe8] sm:$0xff]
        %v1186 = vld [vmem:[#allocation13 + $0xf0] sm:$0xff]
        %v1187 = vld [vmem:[#allocation13 + $0xf8] sm:$0xff]
        %v1188 = vld [vmem:[%s12] sm:$0x3]
        %v1190 = vlaneseq
        %v1191 = vshrl.u32 %v1190, 7
        %v1192 = vsub.s32 0, %v1191
        %v1193 = vrot.slane %v1188, %v1192
        %v1194 = vlaneseq
        %v1195 = vshrl.u32 %v1194, 7
        %v1196 = vsub.s32 1, %v1195
        %v1197 = vrot.slane %v1188, %v1196
        %1200 = vmatprep.subr.mxu0 %v1157
        %1201 = vmatpush1.msra.mxu0 %v1156
        %1202 = vmatprep.subr.mxu0 %v1159
        %1203 = vmatpush1.msra.mxu0 %v1158
        %1204 = vmatprep.subr.mxu0 %v1161
        %1205 = vmatpush1.msra.mxu0 %v1160
        %1206 = vmatprep.subr.mxu0 %v1163
        %1207 = vmatpush1.msra.mxu0 %v1162
        %1208 = vmatprep.subr.mxu0 %v1165
        %1209 = vmatpush1.msra.mxu0 %v1164
        %1210 = vmatprep.subr.mxu0 %v1167
        %1211 = vmatpush1.msra.mxu0 %v1166
        %1212 = vmatprep.subr.mxu0 %v1169
        %1213 = vmatpush1.msra.mxu0 %v1168
        %1214 = vmatprep.subr.mxu0 %v1171
        %1215 = vmatpush1.msra.mxu0 %v1170
        %1216 = vmatprep.subr.mxu0 %v1173
        %1217 = vmatpush1.msra.mxu0 %v1172
        %1218 = vmatprep.subr.mxu0 %v1175
        %1219 = vmatpush1.msra.mxu0 %v1174
        %1220 = vmatprep.subr.mxu0 %v1177
        %1221 = vmatpush1.msra.mxu0 %v1176
        %1222 = vmatprep.subr.mxu0 %v1179
        %1223 = vmatpush1.msra.mxu0 %v1178
        %1224 = vmatprep.subr.mxu0 %v1181
        %1225 = vmatpush1.msra.mxu0 %v1180
        %1226 = vmatprep.subr.mxu0 %v1183
        %1227 = vmatpush1.msra.mxu0 %v1182
        %1228 = vmatprep.subr.mxu0 %v1185
        %1229 = vmatpush1.msra.mxu0 %v1184
        %1230 = vmatprep.subr.mxu0 %v1187
        %1231 = vmatpush1.msra.mxu0 %v1186
        %1232 = vmatprep.subr.mxu0 0.0
        %1233 = vmatpush1.msra.mxu0 0.0
        %1234 = vmatprep.subr.mxu0 0.0
        %1235 = vmatpush1.msra.mxu0 0.0
        %1236 = vmatprep.subr.mxu0 0.0
        %1237 = vmatpush1.msra.mxu0 0.0
        %1238 = vmatprep.subr.mxu0 0.0
        %1239 = vmatpush1.msra.mxu0 0.0
        %1240 = vmatprep.subr.mxu0 0.0
        %1241 = vmatpush1.msra.mxu0 0.0
        %1242 = vmatprep.subr.mxu0 0.0
        %1243 = vmatpush1.msra.mxu0 0.0
        %1244 = vmatprep.subr.mxu0 0.0
        %1245 = vmatpush1.msra.mxu0 0.0
        %1246 = vmatprep.subr.mxu0 0.0
        %1247 = vmatpush1.msra.mxu0 0.0
        %1248 = vmatprep.subr.mxu0 0.0
        %1249 = vmatpush1.msra.mxu0 0.0
        %1250 = vmatprep.subr.mxu0 0.0
        %1251 = vmatpush1.msra.mxu0 0.0
        %1252 = vmatprep.subr.mxu0 0.0
        %1253 = vmatpush1.msra.mxu0 0.0
        %1254 = vmatprep.subr.mxu0 0.0
        %1255 = vmatpush1.msra.mxu0 0.0
        %1256 = vmatprep.subr.mxu0 0.0
        %1257 = vmatpush1.msra.mxu0 0.0
        %1258 = vmatprep.subr.mxu0 0.0
        %1259 = vmatpush1.msra.mxu0 0.0
        %1260 = vmatprep.subr.mxu0 0.0
        %1261 = vmatpush1.msra.mxu0 0.0
        %1262 = vmatprep.subr.mxu0 0.0
        %1263 = vmatpush1.msra.mxu0 0.0
        %1264 = vmatprep.mubr.f32.mxu0 0.0
        %1265 = vmatmul.mubr.f32.gmra.mrb[0].mxu0 %v1155
        %v1266 = vpop.f32.mrb[0].mxu0
        %v1267 = vadd.f32 %v1193, %v1266
        %v1268 = vpop.f32.mrb[0].mxu0
        %v1269 = vadd.f32 %v1197, %v1268
        %1270 = vdwg.mxu0
        %v1271 = vmax.f32 %v1267, 0.0
        %v1272 = vmax.f32 %v1269, 0.0
        %v1273 = vld [vmem:[#allocation14] sm:$0xff]
        %v1274 = vld [vmem:[#allocation14 + $0x8] sm:$0xff]
        %v1275 = vld [vmem:[#allocation14 + $0x10] sm:$0xff]
        %v1276 = vld [vmem:[#allocation14 + $0x18] sm:$0xff]
        %v1277 = vld [vmem:[#allocation14 + $0x20] sm:$0xff]
        %v1278 = vld [vmem:[#allocation14 + $0x28] sm:$0xff]
        %v1279 = vld [vmem:[#allocation14 + $0x30] sm:$0xff]
        %v1280 = vld [vmem:[#allocation14 + $0x38] sm:$0xff]
        %v1281 = vld [vmem:[#allocation14 + $0x40] sm:$0xff]
        %v1282 = vld [vmem:[#allocation14 + $0x48] sm:$0xff]
        %v1283 = vld [vmem:[#allocation14 + $0x50] sm:$0xff]
        %v1284 = vld [vmem:[#allocation14 + $0x58] sm:$0xff]
        %v1285 = vld [vmem:[#allocation14 + $0x60] sm:$0xff]
        %v1286 = vld [vmem:[#allocation14 + $0x68] sm:$0xff]
        %v1287 = vld [vmem:[#allocation14 + $0x70] sm:$0xff]
        %v1288 = vld [vmem:[#allocation14 + $0x78] sm:$0xff]
        %v1289 = vld [vmem:[#allocation14 + $0x80] sm:$0xff]
        %v1290 = vld [vmem:[#allocation14 + $0x88] sm:$0xff]
        %v1291 = vld [vmem:[#allocation14 + $0x90] sm:$0xff]
        %v1292 = vld [vmem:[#allocation14 + $0x98] sm:$0xff]
        %v1293 = vld [vmem:[#allocation14 + $0xa0] sm:$0xff]
        %v1294 = vld [vmem:[#allocation14 + $0xa8] sm:$0xff]
        %v1295 = vld [vmem:[#allocation14 + $0xb0] sm:$0xff]
        %v1296 = vld [vmem:[#allocation14 + $0xb8] sm:$0xff]
        %v1297 = vld [vmem:[#allocation14 + $0xc0] sm:$0xff]
        %v1298 = vld [vmem:[#allocation14 + $0xc8] sm:$0xff]
        %v1299 = vld [vmem:[#allocation14 + $0xd0] sm:$0xff]
        %v1300 = vld [vmem:[#allocation14 + $0xd8] sm:$0xff]
        %v1301 = vld [vmem:[#allocation14 + $0xe0] sm:$0xff]
        %v1302 = vld [vmem:[#allocation14 + $0xe8] sm:$0xff]
        %v1303 = vld [vmem:[#allocation14 + $0xf0] sm:$0xff]
        %v1304 = vld [vmem:[#allocation14 + $0xf8] sm:$0xff]
        %v1305 = vld [vmem:[#allocation14 + $0x100] sm:$0xff]
        %v1306 = vld [vmem:[#allocation14 + $0x108] sm:$0xff]
        %v1307 = vld [vmem:[#allocation14 + $0x110] sm:$0xff]
        %v1308 = vld [vmem:[#allocation14 + $0x118] sm:$0xff]
        %v1309 = vld [vmem:[#allocation14 + $0x120] sm:$0xff]
        %v1310 = vld [vmem:[#allocation14 + $0x128] sm:$0xff]
        %v1311 = vld [vmem:[#allocation14 + $0x130] sm:$0xff]
        %v1312 = vld [vmem:[#allocation14 + $0x138] sm:$0xff]
        %v1313 = vld [vmem:[#allocation14 + $0x140] sm:$0xff]
        %v1314 = vld [vmem:[#allocation14 + $0x148] sm:$0xff]
        %v1315 = vld [vmem:[#allocation14 + $0x150] sm:$0xff]
        %v1316 = vld [vmem:[#allocation14 + $0x158] sm:$0xff]
        %v1317 = vld [vmem:[#allocation14 + $0x160] sm:$0xff]
        %v1318 = vld [vmem:[#allocation14 + $0x168] sm:$0xff]
        %v1319 = vld [vmem:[#allocation14 + $0x170] sm:$0xff]
        %v1320 = vld [vmem:[#allocation14 + $0x178] sm:$0xff]
        %v1321 = vld [vmem:[#allocation14 + $0x180] sm:$0xff]
        %v1322 = vld [vmem:[#allocation14 + $0x188] sm:$0xff]
        %v1323 = vld [vmem:[#allocation14 + $0x190] sm:$0xff]
        %v1324 = vld [vmem:[#allocation14 + $0x198] sm:$0xff]
        %v1325 = vld [vmem:[#allocation14 + $0x1a0] sm:$0xff]
        %v1326 = vld [vmem:[#allocation14 + $0x1a8] sm:$0xff]
        %v1327 = vld [vmem:[#allocation14 + $0x1b0] sm:$0xff]
        %v1328 = vld [vmem:[#allocation14 + $0x1b8] sm:$0xff]
        %v1329 = vld [vmem:[#allocation14 + $0x1c0] sm:$0xff]
        %v1330 = vld [vmem:[#allocation14 + $0x1c8] sm:$0xff]
        %v1331 = vld [vmem:[#allocation14 + $0x1d0] sm:$0xff]
        %v1332 = vld [vmem:[#allocation14 + $0x1d8] sm:$0xff]
        %v1333 = vld [vmem:[#allocation14 + $0x1e0] sm:$0xff]
        %v1334 = vld [vmem:[#allocation14 + $0x1e8] sm:$0xff]
        %v1335 = vld [vmem:[#allocation14 + $0x1f0] sm:$0xff]
        %v1336 = vld [vmem:[#allocation14 + $0x1f8] sm:$0xff]
        %v1337 = vld [vmem:[%s14] sm:$0x3]
        %v1339 = vlaneseq
        %v1340 = vshrl.u32 %v1339, 7
        %v1341 = vsub.s32 0, %v1340
        %v1342 = vrot.slane %v1337, %v1341
        %v1343 = vlaneseq
        %v1344 = vshrl.u32 %v1343, 7
        %v1345 = vsub.s32 1, %v1344
        %v1346 = vrot.slane %v1337, %v1345
        %1349 = vmatprep.subr.mxu0 %v1274
        %1350 = vmatpush1.msra.mxu0 %v1273
        %1351 = vmatprep.subr.mxu0 %v1276
        %1352 = vmatpush1.msra.mxu0 %v1275
        %1353 = vmatprep.subr.mxu0 %v1278
        %1354 = vmatpush1.msra.mxu0 %v1277
        %1355 = vmatprep.subr.mxu0 %v1280
        %1356 = vmatpush1.msra.mxu0 %v1279
        %1357 = vmatprep.subr.mxu0 %v1282
        %1358 = vmatpush1.msra.mxu0 %v1281
        %1359 = vmatprep.subr.mxu0 %v1284
        %1360 = vmatpush1.msra.mxu0 %v1283
        %1361 = vmatprep.subr.mxu0 %v1286
        %1362 = vmatpush1.msra.mxu0 %v1285
        %1363 = vmatprep.subr.mxu0 %v1288
        %1364 = vmatpush1.msra.mxu0 %v1287
        %1365 = vmatprep.subr.mxu0 %v1290
        %1366 = vmatpush1.msra.mxu0 %v1289
        %1367 = vmatprep.subr.mxu0 %v1292
        %1368 = vmatpush1.msra.mxu0 %v1291
        %1369 = vmatprep.subr.mxu0 %v1294
        %1370 = vmatpush1.msra.mxu0 %v1293
        %1371 = vmatprep.subr.mxu0 %v1296
        %1372 = vmatpush1.msra.mxu0 %v1295
        %1373 = vmatprep.subr.mxu0 %v1298
        %1374 = vmatpush1.msra.mxu0 %v1297
        %1375 = vmatprep.subr.mxu0 %v1300
        %1376 = vmatpush1.msra.mxu0 %v1299
        %1377 = vmatprep.subr.mxu0 %v1302
        %1378 = vmatpush1.msra.mxu0 %v1301
        %1379 = vmatprep.subr.mxu0 %v1304
        %1380 = vmatpush1.msra.mxu0 %v1303
        %1381 = vmatprep.subr.mxu0 %v1306
        %1382 = vmatpush1.msra.mxu0 %v1305
        %1383 = vmatprep.subr.mxu0 %v1308
        %1384 = vmatpush1.msra.mxu0 %v1307
        %1385 = vmatprep.subr.mxu0 %v1310
        %1386 = vmatpush1.msra.mxu0 %v1309
        %1387 = vmatprep.subr.mxu0 %v1312
        %1388 = vmatpush1.msra.mxu0 %v1311
        %1389 = vmatprep.subr.mxu0 %v1314
        %1390 = vmatpush1.msra.mxu0 %v1313
        %1391 = vmatprep.subr.mxu0 %v1316
        %1392 = vmatpush1.msra.mxu0 %v1315
        %1393 = vmatprep.subr.mxu0 %v1318
        %1394 = vmatpush1.msra.mxu0 %v1317
        %1395 = vmatprep.subr.mxu0 %v1320
        %1396 = vmatpush1.msra.mxu0 %v1319
        %1397 = vmatprep.subr.mxu0 %v1322
        %1398 = vmatpush1.msra.mxu0 %v1321
        %1399 = vmatprep.subr.mxu0 %v1324
        %1400 = vmatpush1.msra.mxu0 %v1323
        %1401 = vmatprep.subr.mxu0 %v1326
        %1402 = vmatpush1.msra.mxu0 %v1325
        %1403 = vmatprep.subr.mxu0 %v1328
        %1404 = vmatpush1.msra.mxu0 %v1327
        %1405 = vmatprep.subr.mxu0 %v1330
        %1406 = vmatpush1.msra.mxu0 %v1329
        %1407 = vmatprep.subr.mxu0 %v1332
        %1408 = vmatpush1.msra.mxu0 %v1331
        %1409 = vmatprep.subr.mxu0 %v1334
        %1410 = vmatpush1.msra.mxu0 %v1333
        %1411 = vmatprep.subr.mxu0 %v1336
        %1412 = vmatpush1.msra.mxu0 %v1335
        %1413 = vmatprep.mubr.f32.mxu0 %v1272
        %1414 = vmatmul.mubr.f32.gmra.mrb[0].mxu0 %v1271
        %v1415 = vpop.f32.mrb[0].mxu0
        %v1416 = vadd.f32 %v1342, %v1415
        %v1417 = vpop.f32.mrb[0].mxu0
        %v1418 = vadd.f32 %v1346, %v1417
        %1419 = vdwg.mxu0
        %v1420 = vsub.f32 0.0, %v1416
        %v1421 = vsub.f32 0.0, %v1418
        %v1422 = vmul.f32 %v1420, 1.442695
        %v1423 = vpow.pop %v1422
        %v1424 = vmul.f32 %v1421, 1.442695
        %v1425 = vpow.pop %v1424
        %v1426 = vadd.f32 %v1423, 1.0
        %v1427 = vadd.f32 %v1425, 1.0
        %v1428 = vrcp.pop %v1426
        %v1429 = vmul.f32 1.0, %v1428
        %v1430 = vrcp.pop %v1427
        %v1431 = vmul.f32 1.0, %v1430
        %1432 = vst [vmem:[%s612] sm:$0xff] %v1429
        %1433 = vst [vmem:[%s612 + $0x8] sm:$0xff] %v1431
        %s1434 = sand.u32 %s364, 1
        %s1435 = scalar_lea.sflag [#allocation4], %s1434
        %s1436 = sand.u32 %s364, 1
        %s1437 = smul.addr %s1436, 16
        %s1438 = scalar_lea.vmem [#allocation16], %s1437
        // Predicated region
        $region113: #{autoencoder_forward.1} parent=79 // pred_check
          %p1439 = pneg %p374
        $region114: #{autoencoder_forward.1} parent=79 // pred_check_branch
          %1441 = sbr.rel (%p1439) target = $region116
        $region115: #{autoencoder_forward.1} parent=79 // pred_region
          %s1443 = ssub.s32 256, 256
          %1444 = vsyncadd %s1435, %s1443
          %s1445 = smul.addr %s36, 2
          %s1446 = smul.addr %s1445, 128
          %s1447 = scalar_lea.hbm %s15, %s1446
          %s1449 = sshll.u32 %s1438, 4
          %s1450 = int_to_ptr.vmem [resolvable:$true] %s1449
          %1452 = dma.vmem_to_hbm [thread:$0]  %s1450, 256, %s1447, %s1435
        $region116: #{autoencoder_forward.1} parent=79 // pred_fallthru
          _
      $region80: #{autoencoder_forward.1} parent=5 // pred_fallthru
        _
      %p1453 = scmp.le.s32.totalorder 2, %s31
      // Predicated region
      $region117: #{autoencoder_forward.1} parent=5 // pred_check
        %p1454 = pneg %p1453
      $region118: #{autoencoder_forward.1} parent=5 // pred_check_branch
        %1456 = sbr.rel (%p1454) target = $region120
      $region119: #{autoencoder_forward.1} parent=5 // pred_region
        %s1457 = ssub.s32 %s31, 2
        // Predicated region
        $region121: #{autoencoder_forward.1} parent=119 // pred_check
          %p1458 = pneg %p380
        $region122: #{autoencoder_forward.1} parent=119 // pred_check_branch
          %1460 = sbr.rel (%p1458) target = $region124
        $region123: #{autoencoder_forward.1} parent=119 // pred_region
          %s1461 = sand.u32 %s365, 1
          %s1462 = scalar_lea.sflag [#allocation4], %s1461
          %s1463 = sand.u32 %s365, 1
          %s1464 = smul.addr %s1463, 16
          %s1465 = scalar_lea.vmem [#allocation16], %s1464
          %1466 = dma.done %s1462, 256
        $region124: #{autoencoder_forward.1} parent=119 // pred_fallthru
          _
      $region120: #{autoencoder_forward.1} parent=5 // pred_fallthru
        _
    $region6: #{autoencoder_forward.1} parent=1 // loop_footer
      %s35 = sadd.s32 1, %s31
    $region7: #{autoencoder_forward.1} parent=1 // loop_footer_branch
      %30 = sbr.rel target = $region3
    $region8: #{autoencoder_forward.1} parent=1 // loop_exit
      _
    %1467 = vsyncpa [#allocation3], 1
    %s1468 = scalar_lea.sflag [#allocation3], 1
    %1469 = vsyncpa %s1468, 1
    %1470 = vsyncpa [#allocation6], 1
    %1471 = vsyncpa [#allocation9], 1
    %1472 = vsyncpa [#allocation12], 1
    %1473 = vsyncpa [#allocation15], 1
    %1474 = vsyncpa [#allocation4], 1
    %s1475 = scalar_lea.sflag [#allocation4], 1
    %1476 = vsyncpa %s1475, 1

</llo_original>
